<compile_context>
chip_gen: v5e
topology: v5e:2x2
jax: 0.10.0
libtpu: 0.0.40
codegen_flags: <defaults>
</compile_context>

<pallas_src>
import numpy as np
import jax
import jax.numpy as jnp
from jax.experimental import pallas as pl
from jax.experimental.pallas import tpu as pltpu


# --------------------------------------------------------------------------
# Config (mirrors the PyTorch `configs` object)
# --------------------------------------------------------------------------
class Configs:
    input_channels = 4
    mid_channels = 8
    final_out_channels = 16
    kernel_size = 5
    stride = 1
    dropout = 0.5
    features_len = 4


def _aap_matrix(L_in, L_out):
    """PyTorch AdaptiveAvgPool1d as a constant (L_in, L_out) averaging matrix."""
    P = np.zeros((L_in, L_out), np.float32)
    for i in range(L_out):
        s = (i * L_in) // L_out
        e = -((-(i + 1) * L_in) // L_out)          # ceil((i+1)*L_in / L_out)
        P[s:e, i] = 1.0 / (e - s)
    return P


# --------------------------------------------------------------------------
# Single fused kernel: 3 x (conv + BN + ReLU + maxpool) + adaptive avg pool
# --------------------------------------------------------------------------
def _make_fused_kernel(N, blocks):
    """`blocks` holds the static per-block geometry (K, pad, L_out, L_pool)."""

    def kernel(x_ref, w1_ref, s1_ref, w2_ref, s2_ref, w3_ref, s3_ref, pT_ref,
               o_ref, tmp1_ref, tmp2_ref, tmp3_ref):
        w_refs = (w1_ref, w2_ref, w3_ref)
        s_refs = (s1_ref, s2_ref, s3_ref)
        tmp_refs = (tmp1_ref, tmp2_ref, tmp3_ref)

        # Hoist the tiny folded weights / shifts out of the batch loop.
        w_vals = [[w_refs[b][k] for k in range(blocks[b]["K"])]
                  for b in range(3)]
        s_vals = [s_refs[b][...] for b in range(3)]
        pT = pT_ref[...]                                    # (F, L3_pool)

        # Zero the pooling staging buffers once: the never-written rows stay
        # zero and stand in for MaxPool1d's -inf padding (valid because the
        # ReLU output is >= 0 and every pool window has >= 1 valid position).
        for t in tmp_refs:
            t[...] = jnp.zeros_like(t)

        def conv_block(h, b):
            g = blocks[b]
            K, pad, L_out, L_pool = g["K"], g["pad"], g["L_out"], g["L_pool"]
            C_in = h.shape[1]
            zeros = jnp.zeros((pad, C_in), jnp.float32)
            hp = jnp.concatenate([zeros, h, zeros], axis=0)  # (L_in+2p, C_in)
            # Conv1d == sum_k (shifted rows) @ W_k.  The BatchNorm scale is
            # already folded into W_k, so only shift + ReLU remain below.
            acc = jnp.dot(hp[0:L_out, :], w_vals[b][0],
                          preferred_element_type=jnp.float32)
            for k in range(1, K):
                acc = acc + jnp.dot(hp[k:k + L_out, :], w_vals[b][k],
                                    preferred_element_type=jnp.float32)
            y = jnp.maximum(acc + s_vals[b], 0.0)            # BN shift + ReLU
            # MaxPool1d(kernel=2, stride=2, padding=1): window j covers conv
            # positions (2j-1, 2j).  Staging y at row offset 1 turns these
            # into adjacent row pairs (2j, 2j+1), read back with stride 2.
            tmp = tmp_refs[b]
            tmp[pl.ds(1, L_out), :] = y
            return jnp.maximum(tmp[pl.ds(0, L_pool, 2), :],
                               tmp[pl.ds(1, L_pool, 2), :])

        for n in range(N):                                   # N tiny: unroll
            h = x_ref[n]                                     # (L0, C_in)
            h = conv_block(h, 0)
            h = conv_block(h, 1)
            h = conv_block(h, 2)
            # AdaptiveAvgPool1d as (F, L3_pool) @ (L3_pool, C_out).
            o_ref[n] = jnp.dot(pT, h, preferred_element_type=jnp.float32)

    return kernel


def _full_spec(arr):
    ndim = arr.ndim
    return pl.BlockSpec(tuple(arr.shape), lambda i, _n=ndim: (0,) * _n)


def cnn1d_fe_forward(params, x, cfg, *, eps=1e-5):
    """x: (N, C_in, L) float32 -> (N, final_out_channels, features_len)."""
    N, _, L = x.shape
    assert cfg.stride == 1, "fused kernel implements the default stride=1 only"

    block_defs = [
        (params["w1"], params["bn1"], cfg.kernel_size // 2),
        (params["w2"], params["bn2"], 4),
        (params["w3"], params["bn3"], 4),
    ]

    # Fold BatchNorm (inference) into the conv weights + a per-channel shift.
    kernel_inputs, blocks = [], []
    L_cur = L
    for w, (gamma, beta, mean, var), pad in block_defs:
        C_out, _, K = w.shape
        scale = gamma / jnp.sqrt(var + eps)                          # (C_out,)
        w_kco = jnp.transpose(w * scale[:, None, None], (2, 1, 0))   # (K,Cin,Cout)
        shift = (beta - mean * scale)[None, :]                       # (1,C_out)
        L_out = L_cur + 2 * pad - K + 1                    # conv output length
        L_pool = L_out // 2 + 1                            # maxpool(2,2,p=1)
        blocks.append(dict(K=K, pad=pad, L_out=L_out, L_pool=L_pool,
                           C_out=C_out))
        kernel_inputs += [w_kco, shift]
        L_cur = L_pool

    F = cfg.features_len
    C_last = blocks[-1]["C_out"]
    pT = jnp.asarray(_aap_matrix(L_cur, F).T)                # (F, L3_pool)
    x_cl = jnp.transpose(x, (0, 2, 1)).astype(jnp.float32)   # (N, L, C_in)

    args = [x_cl] + kernel_inputs + [pT]

    out = pl.pallas_call(
        _make_fused_kernel(N, blocks),
        out_shape=jax.ShapeDtypeStruct((N, F, C_last), jnp.float32),
        grid=(1,),
        in_specs=[_full_spec(a) for a in args],
        out_specs=pl.BlockSpec((N, F, C_last), lambda i: (0, 0, 0)),
        scratch_shapes=[pltpu.VMEM((2 * b["L_pool"], b["C_out"]), jnp.float32)
                        for b in blocks],
        compiler_params=pltpu.CompilerParams(
            dimension_semantics=("arbitrary",)),
    )(*args)

    return jnp.transpose(out, (0, 2, 1))                     # (N, C_out, F)


# --------------------------------------------------------------------------
# Parameter init (matches PyTorch defaults closely enough for testing)
# --------------------------------------------------------------------------
def init_params(key, cfg):
    keys = jax.random.split(key, 6)

    def conv_w(k, c_out, c_in, ksz):
        bound = 1.0 / np.sqrt(c_in * ksz)
        return jax.random.uniform(k, (c_out, c_in, ksz), jnp.float32,
                                  -bound, bound)

    def bn(k, c):
        k1, k2, k3, k4 = jax.random.split(k, 4)
        gamma = 1.0 + 0.1 * jax.random.normal(k1, (c,), jnp.float32)
        beta = 0.1 * jax.random.normal(k2, (c,), jnp.float32)
        mean = 0.1 * jax.random.normal(k3, (c,), jnp.float32)
        var = jax.random.uniform(k4, (c,), jnp.float32, 0.5, 1.5)
        return gamma, beta, mean, var

    return {
        "w1": conv_w(keys[0], cfg.mid_channels, cfg.input_channels,
                     cfg.kernel_size),
        "bn1": bn(keys[1], cfg.mid_channels),
        "w2": conv_w(keys[2], cfg.mid_channels * 2, cfg.mid_channels, 8),
        "bn2": bn(keys[3], cfg.mid_channels * 2),
        "w3": conv_w(keys[4], cfg.final_out_channels, cfg.mid_channels * 2, 8),
        "bn3": bn(keys[5], cfg.final_out_channels),
    }


# --------------------------------------------------------------------------
# Pure-JAX reference (for self-check)
# --------------------------------------------------------------------------
def _ref_block(x, w, gamma, beta, mean, var, stride, padding, eps=1e-5):
    y = jax.lax.conv_general_dilated(
        x, w, (stride,), [(padding, padding)],
        dimension_numbers=("NCH", "OIH", "NCH"),
        precision=jax.lax.Precision.HIGHEST)
    scale = gamma / jnp.sqrt(var + eps)
    shift = beta - mean * scale
    y = jnp.maximum(y * scale[None, :, None] + shift[None, :, None], 0.0)
    y = jnp.pad(y, ((0, 0), (0, 0), (1, 1)), constant_values=-jnp.inf)
    L_pool = (y.shape[-1] - 2) // 2 + 1
    return jnp.maximum(y[:, :, 0:2 * L_pool:2], y[:, :, 1:2 * L_pool:2])


def ref_forward(params, x, cfg):
    x = _ref_block(x, params["w1"], *params["bn1"],
                   cfg.stride, cfg.kernel_size // 2)
    x = _ref_block(x, params["w2"], *params["bn2"], 1, 4)
    x = _ref_block(x, params["w3"], *params["bn3"], 1, 4)
    P = jnp.asarray(_aap_matrix(x.shape[-1], cfg.features_len))
    return jnp.einsum("ncl,lm->ncm", x, P,
                      precision=jax.lax.Precision.HIGHEST)


# --------------------------------------------------------------------------
if __name__ == "__main__":
    cfg = Configs()
    key = jax.random.PRNGKey(0)
    kp, kx = jax.random.split(key)
    params = init_params(kp, cfg)

    N, L = 2, 32
    x = jax.random.normal(kx, (N, cfg.input_channels, L), jnp.float32)

    fwd = jax.jit(lambda p, xx: cnn1d_fe_forward(p, xx, cfg))
    out = jax.block_until_ready(fwd(params, x))
    assert out.shape == (N, cfg.final_out_channels, cfg.features_len), out.shape
    assert bool(jnp.all(jnp.isfinite(out)))

    ref = jax.block_until_ready(ref_forward(params, x, cfg))
    err = float(jnp.max(jnp.abs(out - ref)))
    assert np.allclose(np.asarray(out), np.asarray(ref),
                       rtol=2e-2, atol=2e-2), err

    print("KERNEL_OK")
</pallas_src>

<mosaic_0001>
module attributes {stable_mosaic.version = 11 : i64} {
  func.func @kernel(%arg0: i32, %arg1: memref<2x32x4xf32, #tpu.memory_space<vmem>>, %arg2: memref<5x4x8xf32, #tpu.memory_space<vmem>>, %arg3: memref<1x8xf32, #tpu.memory_space<vmem>>, %arg4: memref<8x8x16xf32, #tpu.memory_space<vmem>>, %arg5: memref<1x16xf32, #tpu.memory_space<vmem>>, %arg6: memref<8x16x16xf32, #tpu.memory_space<vmem>>, %arg7: memref<1x16xf32, #tpu.memory_space<vmem>>, %arg8: memref<4x6xf32, #tpu.memory_space<vmem>>, %arg9: memref<2x4x16xf32, #tpu.memory_space<vmem>>, %arg10: memref<34x8xf32, #tpu.memory_space<vmem>>, %arg11: memref<20x16xf32, #tpu.memory_space<vmem>>, %arg12: memref<12x16xf32, #tpu.memory_space<vmem>>) attributes {dimension_semantics = [#tpu.dimension_semantics<arbitrary>], iteration_bounds = array<i64: 1>, scalar_prefetch = 0 : i64, scratch_operands = 3 : i64, tpu.core_type = #tpu.core_type<tc>, window_params = [{pipeline_mode = #tpu.pipeline_mode<synchronous>, transform_indices = @transform_0, window_bounds = array<i64: 2, 32, 4>}, {pipeline_mode = #tpu.pipeline_mode<synchronous>, transform_indices = @transform_1, window_bounds = array<i64: 5, 4, 8>}, {pipeline_mode = #tpu.pipeline_mode<synchronous>, transform_indices = @transform_2, window_bounds = array<i64: 1, 8>}, {pipeline_mode = #tpu.pipeline_mode<synchronous>, transform_indices = @transform_3, window_bounds = array<i64: 8, 8, 16>}, {pipeline_mode = #tpu.pipeline_mode<synchronous>, transform_indices = @transform_4, window_bounds = array<i64: 1, 16>}, {pipeline_mode = #tpu.pipeline_mode<synchronous>, transform_indices = @transform_5, window_bounds = array<i64: 8, 16, 16>}, {pipeline_mode = #tpu.pipeline_mode<synchronous>, transform_indices = @transform_6, window_bounds = array<i64: 1, 16>}, {pipeline_mode = #tpu.pipeline_mode<synchronous>, transform_indices = @transform_7, window_bounds = array<i64: 4, 6>}, {pipeline_mode = #tpu.pipeline_mode<synchronous>, transform_indices = @transform_8, window_bounds = array<i64: 2, 4, 16>}]} {
    %c0 = arith.constant 0 : index
    %c0_0 = arith.constant 0 : index
    %c0_1 = arith.constant 0 : index
    %0 = vector.load %arg2[%c0, %c0_0, %c0_1] : memref<5x4x8xf32, #tpu.memory_space<vmem>>, vector<1x4x8xf32>
    %1 = vector.shape_cast %0 : vector<1x4x8xf32> to vector<4x8xf32>
    %c1 = arith.constant 1 : index
    %c0_2 = arith.constant 0 : index
    %c0_3 = arith.constant 0 : index
    %2 = vector.load %arg2[%c1, %c0_2, %c0_3] : memref<5x4x8xf32, #tpu.memory_space<vmem>>, vector<1x4x8xf32>
    %3 = vector.shape_cast %2 : vector<1x4x8xf32> to vector<4x8xf32>
    %c2 = arith.constant 2 : index
    %c0_4 = arith.constant 0 : index
    %c0_5 = arith.constant 0 : index
    %4 = vector.load %arg2[%c2, %c0_4, %c0_5] : memref<5x4x8xf32, #tpu.memory_space<vmem>>, vector<1x4x8xf32>
    %5 = vector.shape_cast %4 : vector<1x4x8xf32> to vector<4x8xf32>
    %c3 = arith.constant 3 : index
    %c0_6 = arith.constant 0 : index
    %c0_7 = arith.constant 0 : index
    %6 = vector.load %arg2[%c3, %c0_6, %c0_7] : memref<5x4x8xf32, #tpu.memory_space<vmem>>, vector<1x4x8xf32>
    %7 = vector.shape_cast %6 : vector<1x4x8xf32> to vector<4x8xf32>
    %c4 = arith.constant 4 : index
    %c0_8 = arith.constant 0 : index
    %c0_9 = arith.constant 0 : index
    %8 = vector.load %arg2[%c4, %c0_8, %c0_9] : memref<5x4x8xf32, #tpu.memory_space<vmem>>, vector<1x4x8xf32>
    %9 = vector.shape_cast %8 : vector<1x4x8xf32> to vector<4x8xf32>
    %c0_10 = arith.constant 0 : index
    %c0_11 = arith.constant 0 : index
    %c0_12 = arith.constant 0 : index
    %10 = vector.load %arg4[%c0_10, %c0_11, %c0_12] : memref<8x8x16xf32, #tpu.memory_space<vmem>>, vector<1x8x16xf32>
    %11 = vector.shape_cast %10 : vector<1x8x16xf32> to vector<8x16xf32>
    %c1_13 = arith.constant 1 : index
    %c0_14 = arith.constant 0 : index
    %c0_15 = arith.constant 0 : index
    %12 = vector.load %arg4[%c1_13, %c0_14, %c0_15] : memref<8x8x16xf32, #tpu.memory_space<vmem>>, vector<1x8x16xf32>
    %13 = vector.shape_cast %12 : vector<1x8x16xf32> to vector<8x16xf32>
    %c2_16 = arith.constant 2 : index
    %c0_17 = arith.constant 0 : index
    %c0_18 = arith.constant 0 : index
    %14 = vector.load %arg4[%c2_16, %c0_17, %c0_18] : memref<8x8x16xf32, #tpu.memory_space<vmem>>, vector<1x8x16xf32>
    %15 = vector.shape_cast %14 : vector<1x8x16xf32> to vector<8x16xf32>
    %c3_19 = arith.constant 3 : index
    %c0_20 = arith.constant 0 : index
    %c0_21 = arith.constant 0 : index
    %16 = vector.load %arg4[%c3_19, %c0_20, %c0_21] : memref<8x8x16xf32, #tpu.memory_space<vmem>>, vector<1x8x16xf32>
    %17 = vector.shape_cast %16 : vector<1x8x16xf32> to vector<8x16xf32>
    %c4_22 = arith.constant 4 : index
    %c0_23 = arith.constant 0 : index
    %c0_24 = arith.constant 0 : index
    %18 = vector.load %arg4[%c4_22, %c0_23, %c0_24] : memref<8x8x16xf32, #tpu.memory_space<vmem>>, vector<1x8x16xf32>
    %19 = vector.shape_cast %18 : vector<1x8x16xf32> to vector<8x16xf32>
    %c5 = arith.constant 5 : index
    %c0_25 = arith.constant 0 : index
    %c0_26 = arith.constant 0 : index
    %20 = vector.load %arg4[%c5, %c0_25, %c0_26] : memref<8x8x16xf32, #tpu.memory_space<vmem>>, vector<1x8x16xf32>
    %21 = vector.shape_cast %20 : vector<1x8x16xf32> to vector<8x16xf32>
    %c6 = arith.constant 6 : index
    %c0_27 = arith.constant 0 : index
    %c0_28 = arith.constant 0 : index
    %22 = vector.load %arg4[%c6, %c0_27, %c0_28] : memref<8x8x16xf32, #tpu.memory_space<vmem>>, vector<1x8x16xf32>
    %23 = vector.shape_cast %22 : vector<1x8x16xf32> to vector<8x16xf32>
    %c7 = arith.constant 7 : index
    %c0_29 = arith.constant 0 : index
    %c0_30 = arith.constant 0 : index
    %24 = vector.load %arg4[%c7, %c0_29, %c0_30] : memref<8x8x16xf32, #tpu.memory_space<vmem>>, vector<1x8x16xf32>
    %25 = vector.shape_cast %24 : vector<1x8x16xf32> to vector<8x16xf32>
    %c0_31 = arith.constant 0 : index
    %c0_32 = arith.constant 0 : index
    %c0_33 = arith.constant 0 : index
    %26 = vector.load %arg6[%c0_31, %c0_32, %c0_33] : memref<8x16x16xf32, #tpu.memory_space<vmem>>, vector<1x16x16xf32>
    %27 = vector.shape_cast %26 : vector<1x16x16xf32> to vector<16x16xf32>
    %c1_34 = arith.constant 1 : index
    %c0_35 = arith.constant 0 : index
    %c0_36 = arith.constant 0 : index
    %28 = vector.load %arg6[%c1_34, %c0_35, %c0_36] : memref<8x16x16xf32, #tpu.memory_space<vmem>>, vector<1x16x16xf32>
    %29 = vector.shape_cast %28 : vector<1x16x16xf32> to vector<16x16xf32>
    %c2_37 = arith.constant 2 : index
    %c0_38 = arith.constant 0 : index
    %c0_39 = arith.constant 0 : index
    %30 = vector.load %arg6[%c2_37, %c0_38, %c0_39] : memref<8x16x16xf32, #tpu.memory_space<vmem>>, vector<1x16x16xf32>
    %31 = vector.shape_cast %30 : vector<1x16x16xf32> to vector<16x16xf32>
    %c3_40 = arith.constant 3 : index
    %c0_41 = arith.constant 0 : index
    %c0_42 = arith.constant 0 : index
    %32 = vector.load %arg6[%c3_40, %c0_41, %c0_42] : memref<8x16x16xf32, #tpu.memory_space<vmem>>, vector<1x16x16xf32>
    %33 = vector.shape_cast %32 : vector<1x16x16xf32> to vector<16x16xf32>
    %c4_43 = arith.constant 4 : index
    %c0_44 = arith.constant 0 : index
    %c0_45 = arith.constant 0 : index
    %34 = vector.load %arg6[%c4_43, %c0_44, %c0_45] : memref<8x16x16xf32, #tpu.memory_space<vmem>>, vector<1x16x16xf32>
    %35 = vector.shape_cast %34 : vector<1x16x16xf32> to vector<16x16xf32>
    %c5_46 = arith.constant 5 : index
    %c0_47 = arith.constant 0 : index
    %c0_48 = arith.constant 0 : index
    %36 = vector.load %arg6[%c5_46, %c0_47, %c0_48] : memref<8x16x16xf32, #tpu.memory_space<vmem>>, vector<1x16x16xf32>
    %37 = vector.shape_cast %36 : vector<1x16x16xf32> to vector<16x16xf32>
    %c6_49 = arith.constant 6 : index
    %c0_50 = arith.constant 0 : index
    %c0_51 = arith.constant 0 : index
    %38 = vector.load %arg6[%c6_49, %c0_50, %c0_51] : memref<8x16x16xf32, #tpu.memory_space<vmem>>, vector<1x16x16xf32>
    %39 = vector.shape_cast %38 : vector<1x16x16xf32> to vector<16x16xf32>
    %c7_52 = arith.constant 7 : index
    %c0_53 = arith.constant 0 : index
    %c0_54 = arith.constant 0 : index
    %40 = vector.load %arg6[%c7_52, %c0_53, %c0_54] : memref<8x16x16xf32, #tpu.memory_space<vmem>>, vector<1x16x16xf32>
    %41 = vector.shape_cast %40 : vector<1x16x16xf32> to vector<16x16xf32>
    %c0_55 = arith.constant 0 : index
    %c0_56 = arith.constant 0 : index
    %42 = vector.load %arg3[%c0_55, %c0_56] : memref<1x8xf32, #tpu.memory_space<vmem>>, vector<1x8xf32>
    %c0_57 = arith.constant 0 : index
    %c0_58 = arith.constant 0 : index
    %43 = vector.load %arg5[%c0_57, %c0_58] : memref<1x16xf32, #tpu.memory_space<vmem>>, vector<1x16xf32>
    %c0_59 = arith.constant 0 : index
    %c0_60 = arith.constant 0 : index
    %44 = vector.load %arg7[%c0_59, %c0_60] : memref<1x16xf32, #tpu.memory_space<vmem>>, vector<1x16xf32>
    %c0_61 = arith.constant 0 : index
    %c0_62 = arith.constant 0 : index
    %45 = vector.load %arg8[%c0_61, %c0_62] : memref<4x6xf32, #tpu.memory_space<vmem>>, vector<4x6xf32>
    %cst = arith.constant 0.000000e+00 : f32
    %46 = vector.broadcast %cst : f32 to vector<34x8xf32>
    %c0_63 = arith.constant 0 : index
    %c0_64 = arith.constant 0 : index
    %47 = vector.load %arg10[%c0_63, %c0_64] : memref<34x8xf32, #tpu.memory_space<vmem>>, vector<34x8xf32>
    tpu.vector_store %arg10[%c0_63, %c0_64], %46 {strides = array<i32>} : memref<34x8xf32, #tpu.memory_space<vmem>>, vector<34x8xf32>,
    %cst_65 = arith.constant 0.000000e+00 : f32
    %48 = vector.broadcast %cst_65 : f32 to vector<20x16xf32>
    %c0_66 = arith.constant 0 : index
    %c0_67 = arith.constant 0 : index
    %49 = vector.load %arg11[%c0_66, %c0_67] : memref<20x16xf32, #tpu.memory_space<vmem>>, vector<20x16xf32>
    tpu.vector_store %arg11[%c0_66, %c0_67], %48 {strides = array<i32>} : memref<20x16xf32, #tpu.memory_space<vmem>>, vector<20x16xf32>,
    %cst_68 = arith.constant 0.000000e+00 : f32
    %50 = vector.broadcast %cst_68 : f32 to vector<12x16xf32>
    %c0_69 = arith.constant 0 : index
    %c0_70 = arith.constant 0 : index
    %51 = vector.load %arg12[%c0_69, %c0_70] : memref<12x16xf32, #tpu.memory_space<vmem>>, vector<12x16xf32>
    tpu.vector_store %arg12[%c0_69, %c0_70], %50 {strides = array<i32>} : memref<12x16xf32, #tpu.memory_space<vmem>>, vector<12x16xf32>,
    %c0_71 = arith.constant 0 : index
    %c0_72 = arith.constant 0 : index
    %c0_73 = arith.constant 0 : index
    %52 = vector.load %arg1[%c0_71, %c0_72, %c0_73] : memref<2x32x4xf32, #tpu.memory_space<vmem>>, vector<1x32x4xf32>
    %53 = vector.shape_cast %52 : vector<1x32x4xf32> to vector<32x4xf32>
    %cst_74 = arith.constant 0.000000e+00 : f32
    %54 = vector.broadcast %cst_74 : f32 to vector<2x4xf32>
    %55 = tpu.concatenate %54, %53, %54 in 0 : vector<2x4xf32>, vector<32x4xf32>, vector<2x4xf32> -> vector<36x4xf32>
    %56 = vector.extract_strided_slice %55 {offsets = [0, 0], sizes = [32, 4], strides = [1, 1]} : vector<36x4xf32> to vector<32x4xf32>
    %cst_75 = arith.constant dense<0.000000e+00> : vector<32x8xf32>
    %57 = tpu.matmul %56, %1, %cst_75 {dimension_numbers = #tpu.dot_dimension_numbers<[1], [0], [0], [1], [0, 0, 1, 1], [], []>} : vector<32x4xf32>, vector<4x8xf32>, vector<32x8xf32> -> vector<32x8xf32>
    %58 = vector.extract_strided_slice %55 {offsets = [1, 0], sizes = [32, 4], strides = [1, 1]} : vector<36x4xf32> to vector<32x4xf32>
    %cst_76 = arith.constant dense<0.000000e+00> : vector<32x8xf32>
    %59 = tpu.matmul %58, %3, %cst_76 {dimension_numbers = #tpu.dot_dimension_numbers<[1], [0], [0], [1], [0, 0, 1, 1], [], []>} : vector<32x4xf32>, vector<4x8xf32>, vector<32x8xf32> -> vector<32x8xf32>
    %60 = arith.addf %57, %59 : vector<32x8xf32>
    %61 = vector.extract_strided_slice %55 {offsets = [2, 0], sizes = [32, 4], strides = [1, 1]} : vector<36x4xf32> to vector<32x4xf32>
    %cst_77 = arith.constant dense<0.000000e+00> : vector<32x8xf32>
    %62 = tpu.matmul %61, %5, %cst_77 {dimension_numbers = #tpu.dot_dimension_numbers<[1], [0], [0], [1], [0, 0, 1, 1], [], []>} : vector<32x4xf32>, vector<4x8xf32>, vector<32x8xf32> -> vector<32x8xf32>
    %63 = arith.addf %60, %62 : vector<32x8xf32>
    %64 = vector.extract_strided_slice %55 {offsets = [3, 0], sizes = [32, 4], strides = [1, 1]} : vector<36x4xf32> to vector<32x4xf32>
    %cst_78 = arith.constant dense<0.000000e+00> : vector<32x8xf32>
    %65 = tpu.matmul %64, %7, %cst_78 {dimension_numbers = #tpu.dot_dimension_numbers<[1], [0], [0], [1], [0, 0, 1, 1], [], []>} : vector<32x4xf32>, vector<4x8xf32>, vector<32x8xf32> -> vector<32x8xf32>
    %66 = arith.addf %63, %65 : vector<32x8xf32>
    %67 = vector.extract_strided_slice %55 {offsets = [4, 0], sizes = [32, 4], strides = [1, 1]} : vector<36x4xf32> to vector<32x4xf32>
    %cst_79 = arith.constant dense<0.000000e+00> : vector<32x8xf32>
    %68 = tpu.matmul %67, %9, %cst_79 {dimension_numbers = #tpu.dot_dimension_numbers<[1], [0], [0], [1], [0, 0, 1, 1], [], []>} : vector<32x4xf32>, vector<4x8xf32>, vector<32x8xf32> -> vector<32x8xf32>
    %69 = arith.addf %66, %68 : vector<32x8xf32>
    %70 = vector.broadcast %42 : vector<1x8xf32> to vector<32x8xf32>
    %71 = arith.addf %69, %70 : vector<32x8xf32>
    %cst_80 = arith.constant 0.000000e+00 : f32
    %72 = vector.broadcast %cst_80 : f32 to vector<32x8xf32>
    %73 = arith.maximumf %71, %72 : vector<32x8xf32>
    %c1_81 = arith.constant 1 : index
    %c0_82 = arith.constant 0 : index
    %74 = vector.load %arg10[%c1_81, %c0_82] : memref<34x8xf32, #tpu.memory_space<vmem>>, vector<32x8xf32>
    tpu.vector_store %arg10[%c1_81, %c0_82], %73 {strides = array<i32>} : memref<34x8xf32, #tpu.memory_space<vmem>>, vector<32x8xf32>,
    %c0_83 = arith.constant 0 : index
    %c0_84 = arith.constant 0 : index
    %75 = tpu.strided_load %arg10[%c0_83, %c0_84] {strides = array<i32: 2, 1>} : memref<34x8xf32, #tpu.memory_space<vmem>>, vector<17x8xf32>
    %c1_85 = arith.constant 1 : index
    %c0_86 = arith.constant 0 : index
    %76 = tpu.strided_load %arg10[%c1_85, %c0_86] {strides = array<i32: 2, 1>} : memref<34x8xf32, #tpu.memory_space<vmem>>, vector<17x8xf32>
    %77 = arith.maximumf %75, %76 : vector<17x8xf32>
    %cst_87 = arith.constant 0.000000e+00 : f32
    %78 = vector.broadcast %cst_87 : f32 to vector<4x8xf32>
    %79 = tpu.concatenate %78, %77, %78 in 0 : vector<4x8xf32>, vector<17x8xf32>, vector<4x8xf32> -> vector<25x8xf32>
    %80 = vector.extract_strided_slice %79 {offsets = [0, 0], sizes = [18, 8], strides = [1, 1]} : vector<25x8xf32> to vector<18x8xf32>
    %cst_88 = arith.constant dense<0.000000e+00> : vector<18x16xf32>
    %81 = tpu.matmul %80, %11, %cst_88 {dimension_numbers = #tpu.dot_dimension_numbers<[1], [0], [0], [1], [0, 0, 1, 1], [], []>} : vector<18x8xf32>, vector<8x16xf32>, vector<18x16xf32> -> vector<18x16xf32>
    %82 = vector.extract_strided_slice %79 {offsets = [1, 0], sizes = [18, 8], strides = [1, 1]} : vector<25x8xf32> to vector<18x8xf32>
    %cst_89 = arith.constant dense<0.000000e+00> : vector<18x16xf32>
    %83 = tpu.matmul %82, %13, %cst_89 {dimension_numbers = #tpu.dot_dimension_numbers<[1], [0], [0], [1], [0, 0, 1, 1], [], []>} : vector<18x8xf32>, vector<8x16xf32>, vector<18x16xf32> -> vector<18x16xf32>
    %84 = arith.addf %81, %83 : vector<18x16xf32>
    %85 = vector.extract_strided_slice %79 {offsets = [2, 0], sizes = [18, 8], strides = [1, 1]} : vector<25x8xf32> to vector<18x8xf32>
    %cst_90 = arith.constant dense<0.000000e+00> : vector<18x16xf32>
    %86 = tpu.matmul %85, %15, %cst_90 {dimension_numbers = #tpu.dot_dimension_numbers<[1], [0], [0], [1], [0, 0, 1, 1], [], []>} : vector<18x8xf32>, vector<8x16xf32>, vector<18x16xf32> -> vector<18x16xf32>
    %87 = arith.addf %84, %86 : vector<18x16xf32>
    %88 = vector.extract_strided_slice %79 {offsets = [3, 0], sizes = [18, 8], strides = [1, 1]} : vector<25x8xf32> to vector<18x8xf32>
    %cst_91 = arith.constant dense<0.000000e+00> : vector<18x16xf32>
    %89 = tpu.matmul %88, %17, %cst_91 {dimension_numbers = #tpu.dot_dimension_numbers<[1], [0], [0], [1], [0, 0, 1, 1], [], []>} : vector<18x8xf32>, vector<8x16xf32>, vector<18x16xf32> -> vector<18x16xf32>
    %90 = arith.addf %87, %89 : vector<18x16xf32>
    %91 = vector.extract_strided_slice %79 {offsets = [4, 0], sizes = [18, 8], strides = [1, 1]} : vector<25x8xf32> to vector<18x8xf32>
    %cst_92 = arith.constant dense<0.000000e+00> : vector<18x16xf32>
    %92 = tpu.matmul %91, %19, %cst_92 {dimension_numbers = #tpu.dot_dimension_numbers<[1], [0], [0], [1], [0, 0, 1, 1], [], []>} : vector<18x8xf32>, vector<8x16xf32>, vector<18x16xf32> -> vector<18x16xf32>
    %93 = arith.addf %90, %92 : vector<18x16xf32>
    %94 = vector.extract_strided_slice %79 {offsets = [5, 0], sizes = [18, 8], strides = [1, 1]} : vector<25x8xf32> to vector<18x8xf32>
    %cst_93 = arith.constant dense<0.000000e+00> : vector<18x16xf32>
    %95 = tpu.matmul %94, %21, %cst_93 {dimension_numbers = #tpu.dot_dimension_numbers<[1], [0], [0], [1], [0, 0, 1, 1], [], []>} : vector<18x8xf32>, vector<8x16xf32>, vector<18x16xf32> -> vector<18x16xf32>
    %96 = arith.addf %93, %95 : vector<18x16xf32>
    %97 = vector.extract_strided_slice %79 {offsets = [6, 0], sizes = [18, 8], strides = [1, 1]} : vector<25x8xf32> to vector<18x8xf32>
    %cst_94 = arith.constant dense<0.000000e+00> : vector<18x16xf32>
    %98 = tpu.matmul %97, %23, %cst_94 {dimension_numbers = #tpu.dot_dimension_numbers<[1], [0], [0], [1], [0, 0, 1, 1], [], []>} : vector<18x8xf32>, vector<8x16xf32>, vector<18x16xf32> -> vector<18x16xf32>
    %99 = arith.addf %96, %98 : vector<18x16xf32>
    %100 = vector.extract_strided_slice %79 {offsets = [7, 0], sizes = [18, 8], strides = [1, 1]} : vector<25x8xf32> to vector<18x8xf32>
    %cst_95 = arith.constant dense<0.000000e+00> : vector<18x16xf32>
    %101 = tpu.matmul %100, %25, %cst_95 {dimension_numbers = #tpu.dot_dimension_numbers<[1], [0], [0], [1], [0, 0, 1, 1], [], []>} : vector<18x8xf32>, vector<8x16xf32>, vector<18x16xf32> -> vector<18x16xf32>
    %102 = arith.addf %99, %101 : vector<18x16xf32>
    %103 = vector.broadcast %43 : vector<1x16xf32> to vector<18x16xf32>
    %104 = arith.addf %102, %103 : vector<18x16xf32>
    %cst_96 = arith.constant 0.000000e+00 : f32
    %105 = vector.broadcast %cst_96 : f32 to vector<18x16xf32>
    %106 = arith.maximumf %104, %105 : vector<18x16xf32>
    %c1_97 = arith.constant 1 : index
    %c0_98 = arith.constant 0 : index
    %107 = vector.load %arg11[%c1_97, %c0_98] : memref<20x16xf32, #tpu.memory_space<vmem>>, vector<18x16xf32>
    tpu.vector_store %arg11[%c1_97, %c0_98], %106 {strides = array<i32>} : memref<20x16xf32, #tpu.memory_space<vmem>>, vector<18x16xf32>,
    %c0_99 = arith.constant 0 : index
    %c0_100 = arith.constant 0 : index
    %108 = tpu.strided_load %arg11[%c0_99, %c0_100] {strides = array<i32: 2, 1>} : memref<20x16xf32, #tpu.memory_space<vmem>>, vector<10x16xf32>
    %c1_101 = arith.constant 1 : index
    %c0_102 = arith.constant 0 : index
    %109 = tpu.strided_load %arg11[%c1_101, %c0_102] {strides = array<i32: 2, 1>} : memref<20x16xf32, #tpu.memory_space<vmem>>, vector<10x16xf32>
    %110 = arith.maximumf %108, %109 : vector<10x16xf32>
    %cst_103 = arith.constant 0.000000e+00 : f32
    %111 = vector.broadcast %cst_103 : f32 to vector<4x16xf32>
    %112 = tpu.concatenate %111, %110, %111 in 0 : vector<4x16xf32>, vector<10x16xf32>, vector<4x16xf32> -> vector<18x16xf32>
    %113 = vector.extract_strided_slice %112 {offsets = [0, 0], sizes = [11, 16], strides = [1, 1]} : vector<18x16xf32> to vector<11x16xf32>
    %cst_104 = arith.constant dense<0.000000e+00> : vector<11x16xf32>
    %114 = tpu.matmul %113, %27, %cst_104 {dimension_numbers = #tpu.dot_dimension_numbers<[1], [0], [0], [1], [0, 0, 1, 1], [], []>} : vector<11x16xf32>, vector<16x16xf32>, vector<11x16xf32> -> vector<11x16xf32>
    %115 = vector.extract_strided_slice %112 {offsets = [1, 0], sizes = [11, 16], strides = [1, 1]} : vector<18x16xf32> to vector<11x16xf32>
    %cst_105 = arith.constant dense<0.000000e+00> : vector<11x16xf32>
    %116 = tpu.matmul %115, %29, %cst_105 {dimension_numbers = #tpu.dot_dimension_numbers<[1], [0], [0], [1], [0, 0, 1, 1], [], []>} : vector<11x16xf32>, vector<16x16xf32>, vector<11x16xf32> -> vector<11x16xf32>
    %117 = arith.addf %114, %116 : vector<11x16xf32>
    %118 = vector.extract_strided_slice %112 {offsets = [2, 0], sizes = [11, 16], strides = [1, 1]} : vector<18x16xf32> to vector<11x16xf32>
    %cst_106 = arith.constant dense<0.000000e+00> : vector<11x16xf32>
    %119 = tpu.matmul %118, %31, %cst_106 {dimension_numbers = #tpu.dot_dimension_numbers<[1], [0], [0], [1], [0, 0, 1, 1], [], []>} : vector<11x16xf32>, vector<16x16xf32>, vector<11x16xf32> -> vector<11x16xf32>
    %120 = arith.addf %117, %119 : vector<11x16xf32>
    %121 = vector.extract_strided_slice %112 {offsets = [3, 0], sizes = [11, 16], strides = [1, 1]} : vector<18x16xf32> to vector<11x16xf32>
    %cst_107 = arith.constant dense<0.000000e+00> : vector<11x16xf32>
    %122 = tpu.matmul %121, %33, %cst_107 {dimension_numbers = #tpu.dot_dimension_numbers<[1], [0], [0], [1], [0, 0, 1, 1], [], []>} : vector<11x16xf32>, vector<16x16xf32>, vector<11x16xf32> -> vector<11x16xf32>
    %123 = arith.addf %120, %122 : vector<11x16xf32>
    %124 = vector.extract_strided_slice %112 {offsets = [4, 0], sizes = [11, 16], strides = [1, 1]} : vector<18x16xf32> to vector<11x16xf32>
    %cst_108 = arith.constant dense<0.000000e+00> : vector<11x16xf32>
    %125 = tpu.matmul %124, %35, %cst_108 {dimension_numbers = #tpu.dot_dimension_numbers<[1], [0], [0], [1], [0, 0, 1, 1], [], []>} : vector<11x16xf32>, vector<16x16xf32>, vector<11x16xf32> -> vector<11x16xf32>
    %126 = arith.addf %123, %125 : vector<11x16xf32>
    %127 = vector.extract_strided_slice %112 {offsets = [5, 0], sizes = [11, 16], strides = [1, 1]} : vector<18x16xf32> to vector<11x16xf32>
    %cst_109 = arith.constant dense<0.000000e+00> : vector<11x16xf32>
    %128 = tpu.matmul %127, %37, %cst_109 {dimension_numbers = #tpu.dot_dimension_numbers<[1], [0], [0], [1], [0, 0, 1, 1], [], []>} : vector<11x16xf32>, vector<16x16xf32>, vector<11x16xf32> -> vector<11x16xf32>
    %129 = arith.addf %126, %128 : vector<11x16xf32>
    %130 = vector.extract_strided_slice %112 {offsets = [6, 0], sizes = [11, 16], strides = [1, 1]} : vector<18x16xf32> to vector<11x16xf32>
    %cst_110 = arith.constant dense<0.000000e+00> : vector<11x16xf32>
    %131 = tpu.matmul %130, %39, %cst_110 {dimension_numbers = #tpu.dot_dimension_numbers<[1], [0], [0], [1], [0, 0, 1, 1], [], []>} : vector<11x16xf32>, vector<16x16xf32>, vector<11x16xf32> -> vector<11x16xf32>
    %132 = arith.addf %129, %131 : vector<11x16xf32>
    %133 = vector.extract_strided_slice %112 {offsets = [7, 0], sizes = [11, 16], strides = [1, 1]} : vector<18x16xf32> to vector<11x16xf32>
    %cst_111 = arith.constant dense<0.000000e+00> : vector<11x16xf32>
    %134 = tpu.matmul %133, %41, %cst_111 {dimension_numbers = #tpu.dot_dimension_numbers<[1], [0], [0], [1], [0, 0, 1, 1], [], []>} : vector<11x16xf32>, vector<16x16xf32>, vector<11x16xf32> -> vector<11x16xf32>
    %135 = arith.addf %132, %134 : vector<11x16xf32>
    %136 = vector.broadcast %44 : vector<1x16xf32> to vector<11x16xf32>
    %137 = arith.addf %135, %136 : vector<11x16xf32>
    %cst_112 = arith.constant 0.000000e+00 : f32
    %138 = vector.broadcast %cst_112 : f32 to vector<11x16xf32>
    %139 = arith.maximumf %137, %138 : vector<11x16xf32>
    %c1_113 = arith.constant 1 : index
    %c0_114 = arith.constant 0 : index
    %140 = vector.load %arg12[%c1_113, %c0_114] : memref<12x16xf32, #tpu.memory_space<vmem>>, vector<11x16xf32>
    tpu.vector_store %arg12[%c1_113, %c0_114], %139 {strides = array<i32>} : memref<12x16xf32, #tpu.memory_space<vmem>>, vector<11x16xf32>,
    %c0_115 = arith.constant 0 : index
    %c0_116 = arith.constant 0 : index
    %141 = tpu.strided_load %arg12[%c0_115, %c0_116] {strides = array<i32: 2, 1>} : memref<12x16xf32, #tpu.memory_space<vmem>>, vector<6x16xf32>
    %c1_117 = arith.constant 1 : index
    %c0_118 = arith.constant 0 : index
    %142 = tpu.strided_load %arg12[%c1_117, %c0_118] {strides = array<i32: 2, 1>} : memref<12x16xf32, #tpu.memory_space<vmem>>, vector<6x16xf32>
    %143 = arith.maximumf %141, %142 : vector<6x16xf32>
    %cst_119 = arith.constant dense<0.000000e+00> : vector<4x16xf32>
    %144 = tpu.matmul %45, %143, %cst_119 {dimension_numbers = #tpu.dot_dimension_numbers<[1], [0], [0], [1], [0, 0, 1, 1], [], []>} : vector<4x6xf32>, vector<6x16xf32>, vector<4x16xf32> -> vector<4x16xf32>
    %c0_120 = arith.constant 0 : index
    %c0_121 = arith.constant 0 : index
    %c0_122 = arith.constant 0 : index
    %145 = vector.load %arg9[%c0_120, %c0_121, %c0_122] : memref<2x4x16xf32, #tpu.memory_space<vmem>>, vector<1x4x16xf32>
    %146 = vector.shape_cast %145 : vector<1x4x16xf32> to vector<4x16xf32>
    %147 = vector.shape_cast %144 : vector<4x16xf32> to vector<1x4x16xf32>
    tpu.vector_store %arg9[%c0_120, %c0_121, %c0_122], %147 {strides = array<i32>} : memref<2x4x16xf32, #tpu.memory_space<vmem>>, vector<1x4x16xf32>,
    %c1_123 = arith.constant 1 : index
    %c0_124 = arith.constant 0 : index
    %c0_125 = arith.constant 0 : index
    %148 = vector.load %arg1[%c1_123, %c0_124, %c0_125] : memref<2x32x4xf32, #tpu.memory_space<vmem>>, vector<1x32x4xf32>
    %149 = vector.shape_cast %148 : vector<1x32x4xf32> to vector<32x4xf32>
    %cst_126 = arith.constant 0.000000e+00 : f32
    %150 = vector.broadcast %cst_126 : f32 to vector<2x4xf32>
    %151 = tpu.concatenate %150, %149, %150 in 0 : vector<2x4xf32>, vector<32x4xf32>, vector<2x4xf32> -> vector<36x4xf32>
    %152 = vector.extract_strided_slice %151 {offsets = [0, 0], sizes = [32, 4], strides = [1, 1]} : vector<36x4xf32> to vector<32x4xf32>
    %cst_127 = arith.constant dense<0.000000e+00> : vector<32x8xf32>
    %153 = tpu.matmul %152, %1, %cst_127 {dimension_numbers = #tpu.dot_dimension_numbers<[1], [0], [0], [1], [0, 0, 1, 1], [], []>} : vector<32x4xf32>, vector<4x8xf32>, vector<32x8xf32> -> vector<32x8xf32>
    %154 = vector.extract_strided_slice %151 {offsets = [1, 0], sizes = [32, 4], strides = [1, 1]} : vector<36x4xf32> to vector<32x4xf32>
    %cst_128 = arith.constant dense<0.000000e+00> : vector<32x8xf32>
    %155 = tpu.matmul %154, %3, %cst_128 {dimension_numbers = #tpu.dot_dimension_numbers<[1], [0], [0], [1], [0, 0, 1, 1], [], []>} : vector<32x4xf32>, vector<4x8xf32>, vector<32x8xf32> -> vector<32x8xf32>
    %156 = arith.addf %153, %155 : vector<32x8xf32>
    %157 = vector.extract_strided_slice %151 {offsets = [2, 0], sizes = [32, 4], strides = [1, 1]} : vector<36x4xf32> to vector<32x4xf32>
    %cst_129 = arith.constant dense<0.000000e+00> : vector<32x8xf32>
    %158 = tpu.matmul %157, %5, %cst_129 {dimension_numbers = #tpu.dot_dimension_numbers<[1], [0], [0], [1], [0, 0, 1, 1], [], []>} : vector<32x4xf32>, vector<4x8xf32>, vector<32x8xf32> -> vector<32x8xf32>
    %159 = arith.addf %156, %158 : vector<32x8xf32>
    %160 = vector.extract_strided_slice %151 {offsets = [3, 0], sizes = [32, 4], strides = [1, 1]} : vector<36x4xf32> to vector<32x4xf32>
    %cst_130 = arith.constant dense<0.000000e+00> : vector<32x8xf32>
    %161 = tpu.matmul %160, %7, %cst_130 {dimension_numbers = #tpu.dot_dimension_numbers<[1], [0], [0], [1], [0, 0, 1, 1], [], []>} : vector<32x4xf32>, vector<4x8xf32>, vector<32x8xf32> -> vector<32x8xf32>
    %162 = arith.addf %159, %161 : vector<32x8xf32>
    %163 = vector.extract_strided_slice %151 {offsets = [4, 0], sizes = [32, 4], strides = [1, 1]} : vector<36x4xf32> to vector<32x4xf32>
    %cst_131 = arith.constant dense<0.000000e+00> : vector<32x8xf32>
    %164 = tpu.matmul %163, %9, %cst_131 {dimension_numbers = #tpu.dot_dimension_numbers<[1], [0], [0], [1], [0, 0, 1, 1], [], []>} : vector<32x4xf32>, vector<4x8xf32>, vector<32x8xf32> -> vector<32x8xf32>
    %165 = arith.addf %162, %164 : vector<32x8xf32>
    %166 = vector.broadcast %42 : vector<1x8xf32> to vector<32x8xf32>
    %167 = arith.addf %165, %166 : vector<32x8xf32>
    %cst_132 = arith.constant 0.000000e+00 : f32
    %168 = vector.broadcast %cst_132 : f32 to vector<32x8xf32>
    %169 = arith.maximumf %167, %168 : vector<32x8xf32>
    %c1_133 = arith.constant 1 : index
    %c0_134 = arith.constant 0 : index
    %170 = vector.load %arg10[%c1_133, %c0_134] : memref<34x8xf32, #tpu.memory_space<vmem>>, vector<32x8xf32>
    tpu.vector_store %arg10[%c1_133, %c0_134], %169 {strides = array<i32>} : memref<34x8xf32, #tpu.memory_space<vmem>>, vector<32x8xf32>,
    %c0_135 = arith.constant 0 : index
    %c0_136 = arith.constant 0 : index
    %171 = tpu.strided_load %arg10[%c0_135, %c0_136] {strides = array<i32: 2, 1>} : memref<34x8xf32, #tpu.memory_space<vmem>>, vector<17x8xf32>
    %c1_137 = arith.constant 1 : index
    %c0_138 = arith.constant 0 : index
    %172 = tpu.strided_load %arg10[%c1_137, %c0_138] {strides = array<i32: 2, 1>} : memref<34x8xf32, #tpu.memory_space<vmem>>, vector<17x8xf32>
    %173 = arith.maximumf %171, %172 : vector<17x8xf32>
    %cst_139 = arith.constant 0.000000e+00 : f32
    %174 = vector.broadcast %cst_139 : f32 to vector<4x8xf32>
    %175 = tpu.concatenate %174, %173, %174 in 0 : vector<4x8xf32>, vector<17x8xf32>, vector<4x8xf32> -> vector<25x8xf32>
    %176 = vector.extract_strided_slice %175 {offsets = [0, 0], sizes = [18, 8], strides = [1, 1]} : vector<25x8xf32> to vector<18x8xf32>
    %cst_140 = arith.constant dense<0.000000e+00> : vector<18x16xf32>
    %177 = tpu.matmul %176, %11, %cst_140 {dimension_numbers = #tpu.dot_dimension_numbers<[1], [0], [0], [1], [0, 0, 1, 1], [], []>} : vector<18x8xf32>, vector<8x16xf32>, vector<18x16xf32> -> vector<18x16xf32>
    %178 = vector.extract_strided_slice %175 {offsets = [1, 0], sizes = [18, 8], strides = [1, 1]} : vector<25x8xf32> to vector<18x8xf32>
    %cst_141 = arith.constant dense<0.000000e+00> : vector<18x16xf32>
    %179 = tpu.matmul %178, %13, %cst_141 {dimension_numbers = #tpu.dot_dimension_numbers<[1], [0], [0], [1], [0, 0, 1, 1], [], []>} : vector<18x8xf32>, vector<8x16xf32>, vector<18x16xf32> -> vector<18x16xf32>
    %180 = arith.addf %177, %179 : vector<18x16xf32>
    %181 = vector.extract_strided_slice %175 {offsets = [2, 0], sizes = [18, 8], strides = [1, 1]} : vector<25x8xf32> to vector<18x8xf32>
    %cst_142 = arith.constant dense<0.000000e+00> : vector<18x16xf32>
    %182 = tpu.matmul %181, %15, %cst_142 {dimension_numbers = #tpu.dot_dimension_numbers<[1], [0], [0], [1], [0, 0, 1, 1], [], []>} : vector<18x8xf32>, vector<8x16xf32>, vector<18x16xf32> -> vector<18x16xf32>
    %183 = arith.addf %180, %182 : vector<18x16xf32>
    %184 = vector.extract_strided_slice %175 {offsets = [3, 0], sizes = [18, 8], strides = [1, 1]} : vector<25x8xf32> to vector<18x8xf32>
    %cst_143 = arith.constant dense<0.000000e+00> : vector<18x16xf32>
    %185 = tpu.matmul %184, %17, %cst_143 {dimension_numbers = #tpu.dot_dimension_numbers<[1], [0], [0], [1], [0, 0, 1, 1], [], []>} : vector<18x8xf32>, vector<8x16xf32>, vector<18x16xf32> -> vector<18x16xf32>
    %186 = arith.addf %183, %185 : vector<18x16xf32>
    %187 = vector.extract_strided_slice %175 {offsets = [4, 0], sizes = [18, 8], strides = [1, 1]} : vector<25x8xf32> to vector<18x8xf32>
    %cst_144 = arith.constant dense<0.000000e+00> : vector<18x16xf32>
    %188 = tpu.matmul %187, %19, %cst_144 {dimension_numbers = #tpu.dot_dimension_numbers<[1], [0], [0], [1], [0, 0, 1, 1], [], []>} : vector<18x8xf32>, vector<8x16xf32>, vector<18x16xf32> -> vector<18x16xf32>
    %189 = arith.addf %186, %188 : vector<18x16xf32>
    %190 = vector.extract_strided_slice %175 {offsets = [5, 0], sizes = [18, 8], strides = [1, 1]} : vector<25x8xf32> to vector<18x8xf32>
    %cst_145 = arith.constant dense<0.000000e+00> : vector<18x16xf32>
    %191 = tpu.matmul %190, %21, %cst_145 {dimension_numbers = #tpu.dot_dimension_numbers<[1], [0], [0], [1], [0, 0, 1, 1], [], []>} : vector<18x8xf32>, vector<8x16xf32>, vector<18x16xf32> -> vector<18x16xf32>
    %192 = arith.addf %189, %191 : vector<18x16xf32>
    %193 = vector.extract_strided_slice %175 {offsets = [6, 0], sizes = [18, 8], strides = [1, 1]} : vector<25x8xf32> to vector<18x8xf32>
    %cst_146 = arith.constant dense<0.000000e+00> : vector<18x16xf32>
    %194 = tpu.matmul %193, %23, %cst_146 {dimension_numbers = #tpu.dot_dimension_numbers<[1], [0], [0], [1], [0, 0, 1, 1], [], []>} : vector<18x8xf32>, vector<8x16xf32>, vector<18x16xf32> -> vector<18x16xf32>
    %195 = arith.addf %192, %194 : vector<18x16xf32>
    %196 = vector.extract_strided_slice %175 {offsets = [7, 0], sizes = [18, 8], strides = [1, 1]} : vector<25x8xf32> to vector<18x8xf32>
    %cst_147 = arith.constant dense<0.000000e+00> : vector<18x16xf32>
    %197 = tpu.matmul %196, %25, %cst_147 {dimension_numbers = #tpu.dot_dimension_numbers<[1], [0], [0], [1], [0, 0, 1, 1], [], []>} : vector<18x8xf32>, vector<8x16xf32>, vector<18x16xf32> -> vector<18x16xf32>
    %198 = arith.addf %195, %197 : vector<18x16xf32>
    %199 = vector.broadcast %43 : vector<1x16xf32> to vector<18x16xf32>
    %200 = arith.addf %198, %199 : vector<18x16xf32>
    %cst_148 = arith.constant 0.000000e+00 : f32
    %201 = vector.broadcast %cst_148 : f32 to vector<18x16xf32>
    %202 = arith.maximumf %200, %201 : vector<18x16xf32>
    %c1_149 = arith.constant 1 : index
    %c0_150 = arith.constant 0 : index
    %203 = vector.load %arg11[%c1_149, %c0_150] : memref<20x16xf32, #tpu.memory_space<vmem>>, vector<18x16xf32>
    tpu.vector_store %arg11[%c1_149, %c0_150], %202 {strides = array<i32>} : memref<20x16xf32, #tpu.memory_space<vmem>>, vector<18x16xf32>,
    %c0_151 = arith.constant 0 : index
    %c0_152 = arith.constant 0 : index
    %204 = tpu.strided_load %arg11[%c0_151, %c0_152] {strides = array<i32: 2, 1>} : memref<20x16xf32, #tpu.memory_space<vmem>>, vector<10x16xf32>
    %c1_153 = arith.constant 1 : index
    %c0_154 = arith.constant 0 : index
    %205 = tpu.strided_load %arg11[%c1_153, %c0_154] {strides = array<i32: 2, 1>} : memref<20x16xf32, #tpu.memory_space<vmem>>, vector<10x16xf32>
    %206 = arith.maximumf %204, %205 : vector<10x16xf32>
    %cst_155 = arith.constant 0.000000e+00 : f32
    %207 = vector.broadcast %cst_155 : f32 to vector<4x16xf32>
    %208 = tpu.concatenate %207, %206, %207 in 0 : vector<4x16xf32>, vector<10x16xf32>, vector<4x16xf32> -> vector<18x16xf32>
    %209 = vector.extract_strided_slice %208 {offsets = [0, 0], sizes = [11, 16], strides = [1, 1]} : vector<18x16xf32> to vector<11x16xf32>
    %cst_156 = arith.constant dense<0.000000e+00> : vector<11x16xf32>
    %210 = tpu.matmul %209, %27, %cst_156 {dimension_numbers = #tpu.dot_dimension_numbers<[1], [0], [0], [1], [0, 0, 1, 1], [], []>} : vector<11x16xf32>, vector<16x16xf32>, vector<11x16xf32> -> vector<11x16xf32>
    %211 = vector.extract_strided_slice %208 {offsets = [1, 0], sizes = [11, 16], strides = [1, 1]} : vector<18x16xf32> to vector<11x16xf32>
    %cst_157 = arith.constant dense<0.000000e+00> : vector<11x16xf32>
    %212 = tpu.matmul %211, %29, %cst_157 {dimension_numbers = #tpu.dot_dimension_numbers<[1], [0], [0], [1], [0, 0, 1, 1], [], []>} : vector<11x16xf32>, vector<16x16xf32>, vector<11x16xf32> -> vector<11x16xf32>
    %213 = arith.addf %210, %212 : vector<11x16xf32>
    %214 = vector.extract_strided_slice %208 {offsets = [2, 0], sizes = [11, 16], strides = [1, 1]} : vector<18x16xf32> to vector<11x16xf32>
    %cst_158 = arith.constant dense<0.000000e+00> : vector<11x16xf32>
    %215 = tpu.matmul %214, %31, %cst_158 {dimension_numbers = #tpu.dot_dimension_numbers<[1], [0], [0], [1], [0, 0, 1, 1], [], []>} : vector<11x16xf32>, vector<16x16xf32>, vector<11x16xf32> -> vector<11x16xf32>
    %216 = arith.addf %213, %215 : vector<11x16xf32>
    %217 = vector.extract_strided_slice %208 {offsets = [3, 0], sizes = [11, 16], strides = [1, 1]} : vector<18x16xf32> to vector<11x16xf32>
    %cst_159 = arith.constant dense<0.000000e+00> : vector<11x16xf32>
    %218 = tpu.matmul %217, %33, %cst_159 {dimension_numbers = #tpu.dot_dimension_numbers<[1], [0], [0], [1], [0, 0, 1, 1], [], []>} : vector<11x16xf32>, vector<16x16xf32>, vector<11x16xf32> -> vector<11x16xf32>
    %219 = arith.addf %216, %218 : vector<11x16xf32>
    %220 = vector.extract_strided_slice %208 {offsets = [4, 0], sizes = [11, 16], strides = [1, 1]} : vector<18x16xf32> to vector<11x16xf32>
    %cst_160 = arith.constant dense<0.000000e+00> : vector<11x16xf32>
    %221 = tpu.matmul %220, %35, %cst_160 {dimension_numbers = #tpu.dot_dimension_numbers<[1], [0], [0], [1], [0, 0, 1, 1], [], []>} : vector<11x16xf32>, vector<16x16xf32>, vector<11x16xf32> -> vector<11x16xf32>
    %222 = arith.addf %219, %221 : vector<11x16xf32>
    %223 = vector.extract_strided_slice %208 {offsets = [5, 0], sizes = [11, 16], strides = [1, 1]} : vector<18x16xf32> to vector<11x16xf32>
    %cst_161 = arith.constant dense<0.000000e+00> : vector<11x16xf32>
    %224 = tpu.matmul %223, %37, %cst_161 {dimension_numbers = #tpu.dot_dimension_numbers<[1], [0], [0], [1], [0, 0, 1, 1], [], []>} : vector<11x16xf32>, vector<16x16xf32>, vector<11x16xf32> -> vector<11x16xf32>
    %225 = arith.addf %222, %224 : vector<11x16xf32>
    %226 = vector.extract_strided_slice %208 {offsets = [6, 0], sizes = [11, 16], strides = [1, 1]} : vector<18x16xf32> to vector<11x16xf32>
    %cst_162 = arith.constant dense<0.000000e+00> : vector<11x16xf32>
    %227 = tpu.matmul %226, %39, %cst_162 {dimension_numbers = #tpu.dot_dimension_numbers<[1], [0], [0], [1], [0, 0, 1, 1], [], []>} : vector<11x16xf32>, vector<16x16xf32>, vector<11x16xf32> -> vector<11x16xf32>
    %228 = arith.addf %225, %227 : vector<11x16xf32>
    %229 = vector.extract_strided_slice %208 {offsets = [7, 0], sizes = [11, 16], strides = [1, 1]} : vector<18x16xf32> to vector<11x16xf32>
    %cst_163 = arith.constant dense<0.000000e+00> : vector<11x16xf32>
    %230 = tpu.matmul %229, %41, %cst_163 {dimension_numbers = #tpu.dot_dimension_numbers<[1], [0], [0], [1], [0, 0, 1, 1], [], []>} : vector<11x16xf32>, vector<16x16xf32>, vector<11x16xf32> -> vector<11x16xf32>
    %231 = arith.addf %228, %230 : vector<11x16xf32>
    %232 = vector.broadcast %44 : vector<1x16xf32> to vector<11x16xf32>
    %233 = arith.addf %231, %232 : vector<11x16xf32>
    %cst_164 = arith.constant 0.000000e+00 : f32
    %234 = vector.broadcast %cst_164 : f32 to vector<11x16xf32>
    %235 = arith.maximumf %233, %234 : vector<11x16xf32>
    %c1_165 = arith.constant 1 : index
    %c0_166 = arith.constant 0 : index
    %236 = vector.load %arg12[%c1_165, %c0_166] : memref<12x16xf32, #tpu.memory_space<vmem>>, vector<11x16xf32>
    tpu.vector_store %arg12[%c1_165, %c0_166], %235 {strides = array<i32>} : memref<12x16xf32, #tpu.memory_space<vmem>>, vector<11x16xf32>,
    %c0_167 = arith.constant 0 : index
    %c0_168 = arith.constant 0 : index
    %237 = tpu.strided_load %arg12[%c0_167, %c0_168] {strides = array<i32: 2, 1>} : memref<12x16xf32, #tpu.memory_space<vmem>>, vector<6x16xf32>
    %c1_169 = arith.constant 1 : index
    %c0_170 = arith.constant 0 : index
    %238 = tpu.strided_load %arg12[%c1_169, %c0_170] {strides = array<i32: 2, 1>} : memref<12x16xf32, #tpu.memory_space<vmem>>, vector<6x16xf32>
    %239 = arith.maximumf %237, %238 : vector<6x16xf32>
    %cst_171 = arith.constant dense<0.000000e+00> : vector<4x16xf32>
    %240 = tpu.matmul %45, %239, %cst_171 {dimension_numbers = #tpu.dot_dimension_numbers<[1], [0], [0], [1], [0, 0, 1, 1], [], []>} : vector<4x6xf32>, vector<6x16xf32>, vector<4x16xf32> -> vector<4x16xf32>
    %c1_172 = arith.constant 1 : index
    %c0_173 = arith.constant 0 : index
    %c0_174 = arith.constant 0 : index
    %241 = vector.load %arg9[%c1_172, %c0_173, %c0_174] : memref<2x4x16xf32, #tpu.memory_space<vmem>>, vector<1x4x16xf32>
    %242 = vector.shape_cast %241 : vector<1x4x16xf32> to vector<4x16xf32>
    %243 = vector.shape_cast %240 : vector<4x16xf32> to vector<1x4x16xf32>
    tpu.vector_store %arg9[%c1_172, %c0_173, %c0_174], %243 {strides = array<i32>} : memref<2x4x16xf32, #tpu.memory_space<vmem>>, vector<1x4x16xf32>,
    return
  }
  func.func @transform_0(%arg0: i32) -> (i32, i32, i32) {
    %c0_i32 = arith.constant 0 : i32
    %c0_i32_0 = arith.constant 0 : i32
    %c0_i32_1 = arith.constant 0 : i32
    %c0_i32_2 = arith.constant 0 : i32
    return %c0_i32, %c0_i32_0, %c0_i32_1 : i32, i32, i32
  }
  func.func @transform_1(%arg0: i32) -> (i32, i32, i32) {
    %c0_i32 = arith.constant 0 : i32
    %c0_i32_0 = arith.constant 0 : i32
    %c0_i32_1 = arith.constant 0 : i32
    %c0_i32_2 = arith.constant 0 : i32
    return %c0_i32, %c0_i32_0, %c0_i32_1 : i32, i32, i32
  }
  func.func @transform_2(%arg0: i32) -> (i32, i32) {
    %c0_i32 = arith.constant 0 : i32
    %c0_i32_0 = arith.constant 0 : i32
    %c0_i32_1 = arith.constant 0 : i32
    return %c0_i32, %c0_i32_0 : i32, i32
  }
  func.func @transform_3(%arg0: i32) -> (i32, i32, i32) {
    %c0_i32 = arith.constant 0 : i32
    %c0_i32_0 = arith.constant 0 : i32
    %c0_i32_1 = arith.constant 0 : i32
    %c0_i32_2 = arith.constant 0 : i32
    return %c0_i32, %c0_i32_0, %c0_i32_1 : i32, i32, i32
  }
  func.func @transform_4(%arg0: i32) -> (i32, i32) {
    %c0_i32 = arith.constant 0 : i32
    %c0_i32_0 = arith.constant 0 : i32
    %c0_i32_1 = arith.constant 0 : i32
    return %c0_i32, %c0_i32_0 : i32, i32
  }
  func.func @transform_5(%arg0: i32) -> (i32, i32, i32) {
    %c0_i32 = arith.constant 0 : i32
    %c0_i32_0 = arith.constant 0 : i32
    %c0_i32_1 = arith.constant 0 : i32
    %c0_i32_2 = arith.constant 0 : i32
    return %c0_i32, %c0_i32_0, %c0_i32_1 : i32, i32, i32
  }
  func.func @transform_6(%arg0: i32) -> (i32, i32) {
    %c0_i32 = arith.constant 0 : i32
    %c0_i32_0 = arith.constant 0 : i32
    %c0_i32_1 = arith.constant 0 : i32
    return %c0_i32, %c0_i32_0 : i32, i32
  }
  func.func @transform_7(%arg0: i32) -> (i32, i32) {
    %c0_i32 = arith.constant 0 : i32
    %c0_i32_0 = arith.constant 0 : i32
    %c0_i32_1 = arith.constant 0 : i32
    return %c0_i32, %c0_i32_0 : i32, i32
  }
  func.func @transform_8(%arg0: i32) -> (i32, i32, i32) {
    %c0_i32 = arith.constant 0 : i32
    %c0_i32_0 = arith.constant 0 : i32
    %c0_i32_1 = arith.constant 0 : i32
    %c0_i32_2 = arith.constant 0 : i32
    return %c0_i32, %c0_i32_0, %c0_i32_1 : i32, i32, i32
  }
}

</mosaic_0001>

<llo_original>
// kernel: _lambda_.1
$region0: #{_lambda_.1}
  #allocation0 [shape = 'u32[]', space=smem, size = 0x4, offset = 0x4, fixed_abs, tag = 'smem constant byte address 0x4 - core index']
  #allocation1 [shape = 'u32[72,128]{1,0:T(1,128)}', space=vmem, size = 0x9000, scoped, tag = 'internal scratch']
  #allocation2 [shape = 'f32[34,8]{1,0:T(8,128)}', space=vmem, size = 0x5000, scoped, tag = 'scratch operand']
  #allocation3 [shape = 'f32[20,16]{1,0:T(8,128)}', space=vmem, size = 0x3000, scoped, tag = 'scratch operand']
  #allocation4 [shape = 'f32[12,16]{1,0:T(8,128)}', space=vmem, size = 0x2000, scoped, tag = 'scratch operand']
  %s0 = inlined_call_operand.vmem [shape: f32[2,32,4], index: 0, kind: input, shape index: {}]
  %s1 = inlined_call_operand.vmem [shape: f32[5,4,8], index: 1, kind: input, shape index: {}]
  %s2 = inlined_call_operand.vmem [shape: f32[1,8], index: 2, kind: input, shape index: {}]
  %s3 = inlined_call_operand.vmem [shape: f32[8,8,16], index: 3, kind: input, shape index: {}]
  %s4 = inlined_call_operand.vmem [shape: f32[1,16], index: 4, kind: input, shape index: {}]
  %s5 = inlined_call_operand.vmem [shape: f32[8,16,16], index: 5, kind: input, shape index: {}]
  %s6 = inlined_call_operand.vmem [shape: f32[1,16], index: 6, kind: input, shape index: {}]
  %s7 = inlined_call_operand.vmem [shape: f32[4,6], index: 7, kind: input, shape index: {}]
  %s8 = inlined_call_operand.hbm [shape: f32[2,4,16], index: 8, kind: output, shape index: {}]
  %s9 = sld [smem:[#allocation0]]
  $region42: #{_lambda_.1} parent=0
    _
  %s11 = ssub.s32 1, %s9
  %s12 = scalar_select 0, %s11, %s9
  $region1: #{_lambda_.1} parent=0
    #allocation5 [shape = 'u8[4096]{0}', space=vmem, size = 0x1000, scoped, tag = 'output window, operand 0, single buffered']
    #allocation6 [shape = 's32[1]{0}', space=sflag, size = 0x4, scoped, tag = 'scoped memory for _lambda_.1']
    %13 = vsyncpa [#allocation6], 0
    // Predicated region
    $region2: #{_lambda_.1} parent=1 // pred_check
      _
    $region3: #{_lambda_.1} parent=1 // pred_check_branch
      %15 = sbr.rel (0) target = $region5
    $region4: #{_lambda_.1} parent=1 // pred_region
      _
    $region5: #{_lambda_.1} parent=1 // pred_fallthru
      _
    // Predicated region
    $region6: #{_lambda_.1} parent=1 // pred_check
      _
    $region7: #{_lambda_.1} parent=1 // pred_check_branch
      %17 = sbr.rel (0) target = $region9
    $region8: #{_lambda_.1} parent=1 // pred_region
      _
    $region9: #{_lambda_.1} parent=1 // pred_fallthru
      _
    // Predicated region
    $region10: #{_lambda_.1} parent=1 // pred_check
      _
    $region11: #{_lambda_.1} parent=1 // pred_check_branch
      %19 = sbr.rel (0) target = $region13
    $region12: #{_lambda_.1} parent=1 // pred_region
      _
    $region13: #{_lambda_.1} parent=1 // pred_fallthru
      _
    // Predicated region
    $region14: #{_lambda_.1} parent=1 // pred_check
      _
    $region15: #{_lambda_.1} parent=1 // pred_check_branch
      %21 = sbr.rel (0) target = $region17
    $region16: #{_lambda_.1} parent=1 // pred_region
      _
    $region17: #{_lambda_.1} parent=1 // pred_fallthru
      _
    // Predicated region
    $region18: #{_lambda_.1} parent=1 // pred_check
      _
    $region19: #{_lambda_.1} parent=1 // pred_check_branch
      %23 = sbr.rel (0) target = $region21
    $region20: #{_lambda_.1} parent=1 // pred_region
      _
    $region21: #{_lambda_.1} parent=1 // pred_fallthru
      _
    // Predicated region
    $region22: #{_lambda_.1} parent=1 // pred_check
      _
    $region23: #{_lambda_.1} parent=1 // pred_check_branch
      %25 = sbr.rel (0) target = $region25
    $region24: #{_lambda_.1} parent=1 // pred_region
      _
    $region25: #{_lambda_.1} parent=1 // pred_fallthru
      _
    // Predicated region
    $region26: #{_lambda_.1} parent=1 // pred_check
      _
    $region27: #{_lambda_.1} parent=1 // pred_check_branch
      %27 = sbr.rel (0) target = $region29
    $region28: #{_lambda_.1} parent=1 // pred_region
      _
    $region29: #{_lambda_.1} parent=1 // pred_fallthru
      _
    // Predicated region
    $region30: #{_lambda_.1} parent=1 // pred_check
      _
    $region31: #{_lambda_.1} parent=1 // pred_check_branch
      %29 = sbr.rel (0) target = $region33
    $region32: #{_lambda_.1} parent=1 // pred_region
      _
    $region33: #{_lambda_.1} parent=1 // pred_fallthru
      _
    %v30 = vld [vmem:[%s1] sm:$0xf]
    %s31 = scalar_lea.vmem %s1, 4
    %v32 = vld [vmem:[%s31] sm:$0xf]
    %s33 = scalar_lea.vmem %s1, 8
    %v34 = vld [vmem:[%s33] sm:$0xf]
    %s35 = scalar_lea.vmem %s1, 12
    %v36 = vld [vmem:[%s35] sm:$0xf]
    %s37 = scalar_lea.vmem %s1, 16
    %v38 = vld [vmem:[%s37] sm:$0xf]
    %v39 = vld [vmem:[%s3] sm:$0xff]
    %s40 = scalar_lea.vmem %s3, 8
    %v41 = vld [vmem:[%s40] sm:$0xff]
    %s42 = scalar_lea.vmem %s3, 16
    %v43 = vld [vmem:[%s42] sm:$0xff]
    %s44 = scalar_lea.vmem %s3, 24
    %v45 = vld [vmem:[%s44] sm:$0xff]
    %s46 = scalar_lea.vmem %s3, 32
    %v47 = vld [vmem:[%s46] sm:$0xff]
    %s48 = scalar_lea.vmem %s3, 40
    %v49 = vld [vmem:[%s48] sm:$0xff]
    %s50 = scalar_lea.vmem %s3, 48
    %v51 = vld [vmem:[%s50] sm:$0xff]
    %s52 = scalar_lea.vmem %s3, 56
    %v53 = vld [vmem:[%s52] sm:$0xff]
    %v54 = vld [vmem:[%s5] sm:$0xff]
    %v55 = vld [vmem:[%s5 + $0x8] sm:$0xff]
    %s56 = scalar_lea.vmem %s5, 16
    %v57 = vld [vmem:[%s56] sm:$0xff]
    %v58 = vld [vmem:[%s56 + $0x8] sm:$0xff]
    %s59 = scalar_lea.vmem %s5, 32
    %v60 = vld [vmem:[%s59] sm:$0xff]
    %v61 = vld [vmem:[%s59 + $0x8] sm:$0xff]
    %s62 = scalar_lea.vmem %s5, 48
    %v63 = vld [vmem:[%s62] sm:$0xff]
    %v64 = vld [vmem:[%s62 + $0x8] sm:$0xff]
    %s65 = scalar_lea.vmem %s5, 64
    %v66 = vld [vmem:[%s65] sm:$0xff]
    %v67 = vld [vmem:[%s65 + $0x8] sm:$0xff]
    %s68 = scalar_lea.vmem %s5, 80
    %v69 = vld [vmem:[%s68] sm:$0xff]
    %v70 = vld [vmem:[%s68 + $0x8] sm:$0xff]
    %s71 = scalar_lea.vmem %s5, 96
    %v72 = vld [vmem:[%s71] sm:$0xff]
    %v73 = vld [vmem:[%s71 + $0x8] sm:$0xff]
    %s74 = scalar_lea.vmem %s5, 112
    %v75 = vld [vmem:[%s74] sm:$0xff]
    %v76 = vld [vmem:[%s74 + $0x8] sm:$0xff]
    %v77 = vld [vmem:[%s2] sm:$0x1]
    %v78 = vld [vmem:[%s4] sm:$0x1]
    %v79 = vld [vmem:[%s6] sm:$0x1]
    %v80 = vld [vmem:[%s7] sm:$0xf]
    %vm81 = vcmask 64512
    %82 = vst.msk [vmem:[#allocation2] sm:$0xff] %vm81, 0.0
    %83 = vst.msk [vmem:[#allocation2 + $0x8] sm:$0xff] %vm81, 0.0
    %84 = vst.msk [vmem:[#allocation2 + $0x10] sm:$0xff] %vm81, 0.0
    %85 = vst.msk [vmem:[#allocation2 + $0x18] sm:$0xff] %vm81, 0.0
    %vm86 = vcmask 58368
    %87 = vst.msk [vmem:[#allocation2 + $0x20] sm:$0x3] %vm86, 0.0
    %vm88 = vcmask 130048
    %89 = vst.msk [vmem:[#allocation3] sm:$0xff] %vm88, 0.0
    %90 = vst.msk [vmem:[#allocation3 + $0x8] sm:$0xff] %vm88, 0.0
    %vm91 = vcmask 125952
    %92 = vst.msk [vmem:[#allocation3 + $0x10] sm:$0xf] %vm91, 0.0
    %93 = vst.msk [vmem:[#allocation4] sm:$0xff] %vm88, 0.0
    %94 = vst.msk [vmem:[#allocation4 + $0x8] sm:$0xf] %vm91, 0.0
    %v95 = vld [vmem:[%s0] sm:$0xff]
    %v96 = vld [vmem:[%s0 + $0x8] sm:$0xff]
    %v97 = vld [vmem:[%s0 + $0x10] sm:$0xff]
    %v98 = vld [vmem:[%s0 + $0x18] sm:$0xff]
    %vm103 = vcmask 1041408
    %v104 = vrot.slane %v95, 6
    %v105 = vrot.slane %v96, 6
    %v106 = vsel %vm103, %v104, %v105
    %v107 = vrot.slane %v97, 6
    %v108 = vsel %vm103, %v105, %v107
    %v109 = vrot.slane %v98, 6
    %v110 = vsel %vm103, %v107, %v109
    %v113 = vsel %vm103, 0.0, %v104
    %v114 = vsel %vm103, %v109, 0.0
    %vm117 = vcmask 1046528
    %v118 = vrot.slane %v113, 1
    %v119 = vrot.slane %v106, 1
    %v120 = vsel %vm117, %v118, %v119
    %v121 = vrot.slane %v108, 1
    %v122 = vsel %vm117, %v119, %v121
    %v123 = vrot.slane %v110, 1
    %v124 = vsel %vm117, %v121, %v123
    %v125 = vrot.slane %v114, 1
    %v126 = vsel %vm117, %v123, %v125
    %vm127 = vcmask 31744
    %v128 = vsel %vm127, %v120, 0
    %v130 = vsel %vm127, %v122, 0
    %v132 = vsel %vm127, %v124, 0
    %v134 = vsel %vm127, %v126, 0
    %vm136 = vcmask 1043456
    %v138 = vsel %vm136, %v32, 0
    %140 = vmatpush.msra.mxu0 0.0
    %141 = vmatpush.msra.mxu0 0.0
    %142 = vmatpush.msra.mxu0 0.0
    %143 = vmatpush.msra.mxu0 0.0
    %144 = vmatpush.msra.mxu0 0.0
    %145 = vmatpush.msra.mxu0 0.0
    %146 = vmatpush.msra.mxu0 0.0
    %147 = vmatpush.msra.mxu0 0.0
    %148 = vmatpush.msra.mxu0 0.0
    %149 = vmatpush.msra.mxu0 0.0
    %150 = vmatpush.msra.mxu0 0.0
    %151 = vmatpush.msra.mxu0 0.0
    %152 = vmatpush.msra.mxu0 0.0
    %153 = vmatpush.msra.mxu0 0.0
    %154 = vmatpush.msra.mxu0 0.0
    %155 = vmatpush.msra.mxu0 %v138
    %156 = vmatmul.f32.gmra.mxu0 %v128
    %v157 = vpop.f32.mrf.mxu0
    %v158 = vadd.f32 0.0, %v157
    %159 = vmatmul.f32.gmra.mxu0 %v130
    %v160 = vpop.f32.mrf.mxu0
    %v161 = vadd.f32 0.0, %v160
    %162 = vmatmul.f32.gmra.mxu0 %v132
    %v163 = vpop.f32.mrf.mxu0
    %v164 = vadd.f32 0.0, %v163
    %165 = vmatmul.f32.gmra.mxu0 %v134
    %v166 = vpop.f32.mrf.mxu0
    %v167 = vadd.f32 0.0, %v166
    %168 = vdwg.mxu0
    %v169 = vsel %vm127, %v113, 0
    %v171 = vsel %vm127, %v106, 0
    %v173 = vsel %vm127, %v108, 0
    %v175 = vsel %vm127, %v110, 0
    %v178 = vsel %vm136, %v30, 0
    %180 = vmatpush.msra.mxu0 0.0
    %181 = vmatpush.msra.mxu0 0.0
    %182 = vmatpush.msra.mxu0 0.0
    %183 = vmatpush.msra.mxu0 0.0
    %184 = vmatpush.msra.mxu0 0.0
    %185 = vmatpush.msra.mxu0 0.0
    %186 = vmatpush.msra.mxu0 0.0
    %187 = vmatpush.msra.mxu0 0.0
    %188 = vmatpush.msra.mxu0 0.0
    %189 = vmatpush.msra.mxu0 0.0
    %190 = vmatpush.msra.mxu0 0.0
    %191 = vmatpush.msra.mxu0 0.0
    %192 = vmatpush.msra.mxu0 0.0
    %193 = vmatpush.msra.mxu0 0.0
    %194 = vmatpush.msra.mxu0 0.0
    %195 = vmatpush.msra.mxu0 %v178
    %196 = vmatmul.f32.gmra.mxu0 %v169
    %v197 = vpop.f32.mrf.mxu0
    %v198 = vadd.f32 %v158, %v197
    %199 = vmatmul.f32.gmra.mxu0 %v171
    %v200 = vpop.f32.mrf.mxu0
    %v201 = vadd.f32 %v161, %v200
    %202 = vmatmul.f32.gmra.mxu0 %v173
    %v203 = vpop.f32.mrf.mxu0
    %v204 = vadd.f32 %v164, %v203
    %205 = vmatmul.f32.gmra.mxu0 %v175
    %v206 = vpop.f32.mrf.mxu0
    %v207 = vadd.f32 %v167, %v206
    %208 = vdwg.mxu0
    %vm209 = vcmask 1045504
    %v210 = vrot.slane %v113, 2
    %v211 = vrot.slane %v106, 2
    %v212 = vsel %vm209, %v210, %v211
    %v213 = vrot.slane %v108, 2
    %v214 = vsel %vm209, %v211, %v213
    %v215 = vrot.slane %v110, 2
    %v216 = vsel %vm209, %v213, %v215
    %v217 = vrot.slane %v114, 2
    %v218 = vsel %vm209, %v215, %v217
    %v219 = vsel %vm127, %v212, 0
    %v221 = vsel %vm127, %v214, 0
    %v223 = vsel %vm127, %v216, 0
    %v225 = vsel %vm127, %v218, 0
    %v228 = vsel %vm136, %v34, 0
    %230 = vmatpush.msra.mxu0 0.0
    %231 = vmatpush.msra.mxu0 0.0
    %232 = vmatpush.msra.mxu0 0.0
    %233 = vmatpush.msra.mxu0 0.0
    %234 = vmatpush.msra.mxu0 0.0
    %235 = vmatpush.msra.mxu0 0.0
    %236 = vmatpush.msra.mxu0 0.0
    %237 = vmatpush.msra.mxu0 0.0
    %238 = vmatpush.msra.mxu0 0.0
    %239 = vmatpush.msra.mxu0 0.0
    %240 = vmatpush.msra.mxu0 0.0
    %241 = vmatpush.msra.mxu0 0.0
    %242 = vmatpush.msra.mxu0 0.0
    %243 = vmatpush.msra.mxu0 0.0
    %244 = vmatpush.msra.mxu0 0.0
    %245 = vmatpush.msra.mxu0 %v228
    %246 = vmatmul.f32.gmra.mxu0 %v219
    %v247 = vpop.f32.mrf.mxu0
    %v248 = vadd.f32 0.0, %v247
    %249 = vmatmul.f32.gmra.mxu0 %v221
    %v250 = vpop.f32.mrf.mxu0
    %v251 = vadd.f32 0.0, %v250
    %252 = vmatmul.f32.gmra.mxu0 %v223
    %v253 = vpop.f32.mrf.mxu0
    %v254 = vadd.f32 0.0, %v253
    %255 = vmatmul.f32.gmra.mxu0 %v225
    %v256 = vpop.f32.mrf.mxu0
    %v257 = vadd.f32 0.0, %v256
    %258 = vdwg.mxu0
    %v259 = vadd.f32 %v198, %v248
    %v260 = vadd.f32 %v201, %v251
    %v261 = vadd.f32 %v204, %v254
    %v262 = vadd.f32 %v207, %v257
    %vm263 = vcmask 1044480
    %v264 = vrot.slane %v113, 3
    %v265 = vrot.slane %v106, 3
    %v266 = vsel %vm263, %v264, %v265
    %v267 = vrot.slane %v108, 3
    %v268 = vsel %vm263, %v265, %v267
    %v269 = vrot.slane %v110, 3
    %v270 = vsel %vm263, %v267, %v269
    %v271 = vrot.slane %v114, 3
    %v272 = vsel %vm263, %v269, %v271
    %v273 = vsel %vm127, %v266, 0
    %v275 = vsel %vm127, %v268, 0
    %v277 = vsel %vm127, %v270, 0
    %v279 = vsel %vm127, %v272, 0
    %v282 = vsel %vm136, %v36, 0
    %284 = vmatpush.msra.mxu0 0.0
    %285 = vmatpush.msra.mxu0 0.0
    %286 = vmatpush.msra.mxu0 0.0
    %287 = vmatpush.msra.mxu0 0.0
    %288 = vmatpush.msra.mxu0 0.0
    %289 = vmatpush.msra.mxu0 0.0
    %290 = vmatpush.msra.mxu0 0.0
    %291 = vmatpush.msra.mxu0 0.0
    %292 = vmatpush.msra.mxu0 0.0
    %293 = vmatpush.msra.mxu0 0.0
    %294 = vmatpush.msra.mxu0 0.0
    %295 = vmatpush.msra.mxu0 0.0
    %296 = vmatpush.msra.mxu0 0.0
    %297 = vmatpush.msra.mxu0 0.0
    %298 = vmatpush.msra.mxu0 0.0
    %299 = vmatpush.msra.mxu0 %v282
    %300 = vmatmul.f32.gmra.mxu0 %v273
    %v301 = vpop.f32.mrf.mxu0
    %v302 = vadd.f32 0.0, %v301
    %303 = vmatmul.f32.gmra.mxu0 %v275
    %v304 = vpop.f32.mrf.mxu0
    %v305 = vadd.f32 0.0, %v304
    %306 = vmatmul.f32.gmra.mxu0 %v277
    %v307 = vpop.f32.mrf.mxu0
    %v308 = vadd.f32 0.0, %v307
    %309 = vmatmul.f32.gmra.mxu0 %v279
    %v310 = vpop.f32.mrf.mxu0
    %v311 = vadd.f32 0.0, %v310
    %312 = vdwg.mxu0
    %v313 = vadd.f32 %v259, %v302
    %v314 = vadd.f32 %v260, %v305
    %v315 = vadd.f32 %v261, %v308
    %v316 = vadd.f32 %v262, %v311
    %v317 = vrot.slane %v113, 4
    %v318 = vrot.slane %v106, 4
    %v319 = vsel %vm136, %v317, %v318
    %v320 = vrot.slane %v108, 4
    %v321 = vsel %vm136, %v318, %v320
    %v322 = vrot.slane %v110, 4
    %v323 = vsel %vm136, %v320, %v322
    %v324 = vrot.slane %v114, 4
    %v325 = vsel %vm136, %v322, %v324
    %v326 = vsel %vm127, %v319, 0
    %v328 = vsel %vm127, %v321, 0
    %v330 = vsel %vm127, %v323, 0
    %v332 = vsel %vm127, %v325, 0
    %v335 = vsel %vm136, %v38, 0
    %337 = vmatpush.msra.mxu0 0.0
    %338 = vmatpush.msra.mxu0 0.0
    %339 = vmatpush.msra.mxu0 0.0
    %340 = vmatpush.msra.mxu0 0.0
    %341 = vmatpush.msra.mxu0 0.0
    %342 = vmatpush.msra.mxu0 0.0
    %343 = vmatpush.msra.mxu0 0.0
    %344 = vmatpush.msra.mxu0 0.0
    %345 = vmatpush.msra.mxu0 0.0
    %346 = vmatpush.msra.mxu0 0.0
    %347 = vmatpush.msra.mxu0 0.0
    %348 = vmatpush.msra.mxu0 0.0
    %349 = vmatpush.msra.mxu0 0.0
    %350 = vmatpush.msra.mxu0 0.0
    %351 = vmatpush.msra.mxu0 0.0
    %352 = vmatpush.msra.mxu0 %v335
    %353 = vmatmul.f32.gmra.mxu0 %v326
    %v354 = vpop.f32.mrf.mxu0
    %v355 = vadd.f32 0.0, %v354
    %356 = vmatmul.f32.gmra.mxu0 %v328
    %v357 = vpop.f32.mrf.mxu0
    %v358 = vadd.f32 0.0, %v357
    %359 = vmatmul.f32.gmra.mxu0 %v330
    %v360 = vpop.f32.mrf.mxu0
    %v361 = vadd.f32 0.0, %v360
    %362 = vmatmul.f32.gmra.mxu0 %v332
    %v363 = vpop.f32.mrf.mxu0
    %v364 = vadd.f32 0.0, %v363
    %365 = vdwg.mxu0
    %v366 = vadd.f32 %v313, %v355
    %v367 = vadd.f32 %v314, %v358
    %v368 = vadd.f32 %v315, %v361
    %v369 = vadd.f32 %v316, %v364
    %v371 = vperm.slane %v77, 0
    %v373 = vadd.f32 %v366, %v371
    %v374 = vadd.f32 %v367, %v371
    %v375 = vadd.f32 %v368, %v371
    %v376 = vadd.f32 %v369, %v371
    %v377 = vmax.f32 %v373, 0.0
    %v378 = vmax.f32 %v374, 0.0
    %v379 = vmax.f32 %v375, 0.0
    %v380 = vmax.f32 %v376, 0.0
    %381 = vst.msk [vmem:[#allocation2 + $0x1] sm:$0xff] %vm81, %v377
    %382 = vst.msk [vmem:[#allocation2 + $0x9] sm:$0xff] %vm81, %v378
    %383 = vst.msk [vmem:[#allocation2 + $0x11] sm:$0xff] %vm81, %v379
    %384 = vst.msk [vmem:[#allocation2 + $0x19] sm:$0xff] %vm81, %v380
    %v385 = vld [vmem:[#allocation2] ss:$2 sm:$0xff]
    %s386 = scalar_lea.vmem [#allocation2], 16
    %v387 = vld [vmem:[%s386] ss:$2 sm:$0xff]
    %s388 = scalar_lea.vmem [#allocation2], 32
    %v389 = vld [vmem:[%s388] ss:$2 sm:$0x1]
    %s390 = scalar_lea.vmem [#allocation2], 1
    %v391 = vld [vmem:[%s390] ss:$2 sm:$0xff]
    %s392 = scalar_lea.vmem [#allocation2], 17
    %v393 = vld [vmem:[%s392] ss:$2 sm:$0xff]
    %s394 = scalar_lea.vmem [#allocation2], 33
    %v395 = vld [vmem:[%s394] ss:$2 sm:$0x1]
    %v396 = vmax.f32 %v385, %v391
    %v397 = vmax.f32 %v387, %v393
    %v398 = vmax.f32 %v389, %v395
    %v402 = vrot.slane %v396, 4
    %v403 = vrot.slane %v397, 4
    %v404 = vsel %vm136, %v402, %v403
    %v405 = vrot.slane %v398, 4
    %v406 = vsel %vm136, %v403, %v405
    %v409 = vsel %vm136, 0.0, %v402
    %v410 = vsel %vm263, %v406, 0.0
    %v413 = vrot.slane %v409, 1
    %v414 = vrot.slane %v404, 1
    %v415 = vsel %vm117, %v413, %v414
    %v416 = vrot.slane %v410, 1
    %v417 = vsel %vm117, %v414, %v416
    %v418 = vsel %vm81, %v415, 0
    %v420 = vsel %vm81, %v417, 0
    %v422 = vsel %vm81, %v416, 0
    %424 = vmatpush.msra.mxu0 0.0
    %425 = vmatpush.msra.mxu0 0.0
    %426 = vmatpush.msra.mxu0 0.0
    %427 = vmatpush.msra.mxu0 0.0
    %428 = vmatpush.msra.mxu0 0.0
    %429 = vmatpush.msra.mxu0 0.0
    %430 = vmatpush.msra.mxu0 0.0
    %431 = vmatpush.msra.mxu0 0.0
    %432 = vmatpush.msra.mxu0 0.0
    %433 = vmatpush.msra.mxu0 0.0
    %434 = vmatpush.msra.mxu0 0.0
    %435 = vmatpush.msra.mxu0 0.0
    %436 = vmatpush.msra.mxu0 0.0
    %437 = vmatpush.msra.mxu0 0.0
    %438 = vmatpush.msra.mxu0 0.0
    %439 = vmatpush.msra.mxu0 %v41
    %440 = vmatmul.f32.gmra.mxu0 %v418
    %v441 = vpop.f32.mrf.mxu0
    %v442 = vadd.f32 0.0, %v441
    %443 = vmatmul.f32.gmra.mxu0 %v420
    %v444 = vpop.f32.mrf.mxu0
    %v445 = vadd.f32 0.0, %v444
    %446 = vmatmul.f32.gmra.mxu0 %v422
    %v447 = vpop.f32.mrf.mxu0
    %v448 = vadd.f32 0.0, %v447
    %449 = vdwg.mxu0
    %v450 = vsel %vm81, %v409, 0
    %v452 = vsel %vm81, %v404, 0
    %v454 = vsel %vm81, %v410, 0
    %456 = vmatpush.msra.mxu0 0.0
    %457 = vmatpush.msra.mxu0 0.0
    %458 = vmatpush.msra.mxu0 0.0
    %459 = vmatpush.msra.mxu0 0.0
    %460 = vmatpush.msra.mxu0 0.0
    %461 = vmatpush.msra.mxu0 0.0
    %462 = vmatpush.msra.mxu0 0.0
    %463 = vmatpush.msra.mxu0 0.0
    %464 = vmatpush.msra.mxu0 0.0
    %465 = vmatpush.msra.mxu0 0.0
    %466 = vmatpush.msra.mxu0 0.0
    %467 = vmatpush.msra.mxu0 0.0
    %468 = vmatpush.msra.mxu0 0.0
    %469 = vmatpush.msra.mxu0 0.0
    %470 = vmatpush.msra.mxu0 0.0
    %471 = vmatpush.msra.mxu0 %v39
    %472 = vmatmul.f32.gmra.mxu0 %v450
    %v473 = vpop.f32.mrf.mxu0
    %v474 = vadd.f32 %v442, %v473
    %475 = vmatmul.f32.gmra.mxu0 %v452
    %v476 = vpop.f32.mrf.mxu0
    %v477 = vadd.f32 %v445, %v476
    %478 = vmatmul.f32.gmra.mxu0 %v454
    %v479 = vpop.f32.mrf.mxu0
    %v480 = vadd.f32 %v448, %v479
    %481 = vdwg.mxu0
    %v482 = vrot.slane %v409, 2
    %v483 = vrot.slane %v404, 2
    %v484 = vsel %vm209, %v482, %v483
    %v485 = vrot.slane %v410, 2
    %v486 = vsel %vm209, %v483, %v485
    %v487 = vsel %vm81, %v484, 0
    %v489 = vsel %vm81, %v486, 0
    %v491 = vsel %vm81, %v485, 0
    %493 = vmatpush.msra.mxu0 0.0
    %494 = vmatpush.msra.mxu0 0.0
    %495 = vmatpush.msra.mxu0 0.0
    %496 = vmatpush.msra.mxu0 0.0
    %497 = vmatpush.msra.mxu0 0.0
    %498 = vmatpush.msra.mxu0 0.0
    %499 = vmatpush.msra.mxu0 0.0
    %500 = vmatpush.msra.mxu0 0.0
    %501 = vmatpush.msra.mxu0 0.0
    %502 = vmatpush.msra.mxu0 0.0
    %503 = vmatpush.msra.mxu0 0.0
    %504 = vmatpush.msra.mxu0 0.0
    %505 = vmatpush.msra.mxu0 0.0
    %506 = vmatpush.msra.mxu0 0.0
    %507 = vmatpush.msra.mxu0 0.0
    %508 = vmatpush.msra.mxu0 %v43
    %509 = vmatmul.f32.gmra.mxu0 %v487
    %v510 = vpop.f32.mrf.mxu0
    %v511 = vadd.f32 0.0, %v510
    %512 = vmatmul.f32.gmra.mxu0 %v489
    %v513 = vpop.f32.mrf.mxu0
    %v514 = vadd.f32 0.0, %v513
    %515 = vmatmul.f32.gmra.mxu0 %v491
    %v516 = vpop.f32.mrf.mxu0
    %v517 = vadd.f32 0.0, %v516
    %518 = vdwg.mxu0
    %v519 = vadd.f32 %v474, %v511
    %v520 = vadd.f32 %v477, %v514
    %v521 = vadd.f32 %v480, %v517
    %v522 = vrot.slane %v409, 3
    %v523 = vrot.slane %v404, 3
    %v524 = vsel %vm263, %v522, %v523
    %v525 = vrot.slane %v410, 3
    %v526 = vsel %vm263, %v523, %v525
    %v527 = vsel %vm81, %v524, 0
    %v529 = vsel %vm81, %v526, 0
    %v531 = vsel %vm81, %v525, 0
    %533 = vmatpush.msra.mxu0 0.0
    %534 = vmatpush.msra.mxu0 0.0
    %535 = vmatpush.msra.mxu0 0.0
    %536 = vmatpush.msra.mxu0 0.0
    %537 = vmatpush.msra.mxu0 0.0
    %538 = vmatpush.msra.mxu0 0.0
    %539 = vmatpush.msra.mxu0 0.0
    %540 = vmatpush.msra.mxu0 0.0
    %541 = vmatpush.msra.mxu0 0.0
    %542 = vmatpush.msra.mxu0 0.0
    %543 = vmatpush.msra.mxu0 0.0
    %544 = vmatpush.msra.mxu0 0.0
    %545 = vmatpush.msra.mxu0 0.0
    %546 = vmatpush.msra.mxu0 0.0
    %547 = vmatpush.msra.mxu0 0.0
    %548 = vmatpush.msra.mxu0 %v45
    %549 = vmatmul.f32.gmra.mxu0 %v527
    %v550 = vpop.f32.mrf.mxu0
    %v551 = vadd.f32 0.0, %v550
    %552 = vmatmul.f32.gmra.mxu0 %v529
    %v553 = vpop.f32.mrf.mxu0
    %v554 = vadd.f32 0.0, %v553
    %555 = vmatmul.f32.gmra.mxu0 %v531
    %v556 = vpop.f32.mrf.mxu0
    %v557 = vadd.f32 0.0, %v556
    %558 = vdwg.mxu0
    %v559 = vadd.f32 %v519, %v551
    %v560 = vadd.f32 %v520, %v554
    %v561 = vadd.f32 %v521, %v557
    %v562 = vrot.slane %v409, 4
    %v563 = vrot.slane %v404, 4
    %v564 = vsel %vm136, %v562, %v563
    %v565 = vrot.slane %v410, 4
    %v566 = vsel %vm136, %v563, %v565
    %v567 = vsel %vm81, %v564, 0
    %v569 = vsel %vm81, %v566, 0
    %v571 = vsel %vm81, %v565, 0
    %573 = vmatpush.msra.mxu0 0.0
    %574 = vmatpush.msra.mxu0 0.0
    %575 = vmatpush.msra.mxu0 0.0
    %576 = vmatpush.msra.mxu0 0.0
    %577 = vmatpush.msra.mxu0 0.0
    %578 = vmatpush.msra.mxu0 0.0
    %579 = vmatpush.msra.mxu0 0.0
    %580 = vmatpush.msra.mxu0 0.0
    %581 = vmatpush.msra.mxu0 0.0
    %582 = vmatpush.msra.mxu0 0.0
    %583 = vmatpush.msra.mxu0 0.0
    %584 = vmatpush.msra.mxu0 0.0
    %585 = vmatpush.msra.mxu0 0.0
    %586 = vmatpush.msra.mxu0 0.0
    %587 = vmatpush.msra.mxu0 0.0
    %588 = vmatpush.msra.mxu0 %v47
    %589 = vmatmul.f32.gmra.mxu0 %v567
    %v590 = vpop.f32.mrf.mxu0
    %v591 = vadd.f32 0.0, %v590
    %592 = vmatmul.f32.gmra.mxu0 %v569
    %v593 = vpop.f32.mrf.mxu0
    %v594 = vadd.f32 0.0, %v593
    %595 = vmatmul.f32.gmra.mxu0 %v571
    %v596 = vpop.f32.mrf.mxu0
    %v597 = vadd.f32 0.0, %v596
    %598 = vdwg.mxu0
    %v599 = vadd.f32 %v559, %v591
    %v600 = vadd.f32 %v560, %v594
    %v601 = vadd.f32 %v561, %v597
    %vm602 = vcmask 1042432
    %v603 = vrot.slane %v409, 5
    %v604 = vrot.slane %v404, 5
    %v605 = vsel %vm602, %v603, %v604
    %v606 = vrot.slane %v410, 5
    %v607 = vsel %vm602, %v604, %v606
    %v608 = vsel %vm81, %v605, 0
    %v610 = vsel %vm81, %v607, 0
    %v612 = vsel %vm81, %v606, 0
    %614 = vmatpush.msra.mxu0 0.0
    %615 = vmatpush.msra.mxu0 0.0
    %616 = vmatpush.msra.mxu0 0.0
    %617 = vmatpush.msra.mxu0 0.0
    %618 = vmatpush.msra.mxu0 0.0
    %619 = vmatpush.msra.mxu0 0.0
    %620 = vmatpush.msra.mxu0 0.0
    %621 = vmatpush.msra.mxu0 0.0
    %622 = vmatpush.msra.mxu0 0.0
    %623 = vmatpush.msra.mxu0 0.0
    %624 = vmatpush.msra.mxu0 0.0
    %625 = vmatpush.msra.mxu0 0.0
    %626 = vmatpush.msra.mxu0 0.0
    %627 = vmatpush.msra.mxu0 0.0
    %628 = vmatpush.msra.mxu0 0.0
    %629 = vmatpush.msra.mxu0 %v49
    %630 = vmatmul.f32.gmra.mxu0 %v608
    %v631 = vpop.f32.mrf.mxu0
    %v632 = vadd.f32 0.0, %v631
    %633 = vmatmul.f32.gmra.mxu0 %v610
    %v634 = vpop.f32.mrf.mxu0
    %v635 = vadd.f32 0.0, %v634
    %636 = vmatmul.f32.gmra.mxu0 %v612
    %v637 = vpop.f32.mrf.mxu0
    %v638 = vadd.f32 0.0, %v637
    %639 = vdwg.mxu0
    %v640 = vadd.f32 %v599, %v632
    %v641 = vadd.f32 %v600, %v635
    %v642 = vadd.f32 %v601, %v638
    %v643 = vrot.slane %v409, 6
    %v644 = vrot.slane %v404, 6
    %v645 = vsel %vm103, %v643, %v644
    %v646 = vrot.slane %v410, 6
    %v647 = vsel %vm103, %v644, %v646
    %v648 = vsel %vm81, %v645, 0
    %v650 = vsel %vm81, %v647, 0
    %v652 = vsel %vm81, %v646, 0
    %654 = vmatpush.msra.mxu0 0.0
    %655 = vmatpush.msra.mxu0 0.0
    %656 = vmatpush.msra.mxu0 0.0
    %657 = vmatpush.msra.mxu0 0.0
    %658 = vmatpush.msra.mxu0 0.0
    %659 = vmatpush.msra.mxu0 0.0
    %660 = vmatpush.msra.mxu0 0.0
    %661 = vmatpush.msra.mxu0 0.0
    %662 = vmatpush.msra.mxu0 0.0
    %663 = vmatpush.msra.mxu0 0.0
    %664 = vmatpush.msra.mxu0 0.0
    %665 = vmatpush.msra.mxu0 0.0
    %666 = vmatpush.msra.mxu0 0.0
    %667 = vmatpush.msra.mxu0 0.0
    %668 = vmatpush.msra.mxu0 0.0
    %669 = vmatpush.msra.mxu0 %v51
    %670 = vmatmul.f32.gmra.mxu0 %v648
    %v671 = vpop.f32.mrf.mxu0
    %v672 = vadd.f32 0.0, %v671
    %673 = vmatmul.f32.gmra.mxu0 %v650
    %v674 = vpop.f32.mrf.mxu0
    %v675 = vadd.f32 0.0, %v674
    %676 = vmatmul.f32.gmra.mxu0 %v652
    %v677 = vpop.f32.mrf.mxu0
    %v678 = vadd.f32 0.0, %v677
    %679 = vdwg.mxu0
    %v680 = vadd.f32 %v640, %v672
    %v681 = vadd.f32 %v641, %v675
    %v682 = vadd.f32 %v642, %v678
    %vm684 = vcmask 1040384
    %v685 = vrot.slane %v409, 7
    %v686 = vrot.slane %v404, 7
    %v687 = vsel %vm684, %v685, %v686
    %v688 = vrot.slane %v410, 7
    %v689 = vsel %vm684, %v686, %v688
    %v690 = vrot.slane 0.0, 7
    %v691 = vsel %vm684, %v688, %v690
    %v692 = vsel %vm81, %v687, 0
    %v694 = vsel %vm81, %v689, 0
    %v696 = vsel %vm81, %v691, 0
    %698 = vmatpush.msra.mxu0 0.0
    %699 = vmatpush.msra.mxu0 0.0
    %700 = vmatpush.msra.mxu0 0.0
    %701 = vmatpush.msra.mxu0 0.0
    %702 = vmatpush.msra.mxu0 0.0
    %703 = vmatpush.msra.mxu0 0.0
    %704 = vmatpush.msra.mxu0 0.0
    %705 = vmatpush.msra.mxu0 0.0
    %706 = vmatpush.msra.mxu0 0.0
    %707 = vmatpush.msra.mxu0 0.0
    %708 = vmatpush.msra.mxu0 0.0
    %709 = vmatpush.msra.mxu0 0.0
    %710 = vmatpush.msra.mxu0 0.0
    %711 = vmatpush.msra.mxu0 0.0
    %712 = vmatpush.msra.mxu0 0.0
    %713 = vmatpush.msra.mxu0 %v53
    %714 = vmatmul.f32.gmra.mxu0 %v692
    %v715 = vpop.f32.mrf.mxu0
    %v716 = vadd.f32 0.0, %v715
    %717 = vmatmul.f32.gmra.mxu0 %v694
    %v718 = vpop.f32.mrf.mxu0
    %v719 = vadd.f32 0.0, %v718
    %720 = vmatmul.f32.gmra.mxu0 %v696
    %v721 = vpop.f32.mrf.mxu0
    %v722 = vadd.f32 0.0, %v721
    %723 = vdwg.mxu0
    %v724 = vadd.f32 %v680, %v716
    %v725 = vadd.f32 %v681, %v719
    %v726 = vadd.f32 %v682, %v722
    %v728 = vperm.slane %v78, 0
    %v730 = vadd.f32 %v724, %v728
    %v731 = vadd.f32 %v725, %v728
    %v732 = vadd.f32 %v726, %v728
    %v733 = vmax.f32 %v730, 0.0
    %v734 = vmax.f32 %v731, 0.0
    %v735 = vmax.f32 %v732, 0.0
    %736 = vst.msk [vmem:[#allocation3 + $0x1] sm:$0xff] %vm88, %v733
    %737 = vst.msk [vmem:[#allocation3 + $0x9] sm:$0xff] %vm88, %v734
    %vm738 = vcmask 123904
    %739 = vst.msk [vmem:[#allocation3 + $0x11] sm:$0x3] %vm738, %v735
    %v740 = vld [vmem:[#allocation3] ss:$2 sm:$0xff]
    %s741 = scalar_lea.vmem [#allocation3], 16
    %v742 = vld [vmem:[%s741] ss:$2 sm:$0x3]
    %s743 = scalar_lea.vmem [#allocation3], 1
    %v744 = vld [vmem:[%s743] ss:$2 sm:$0xff]
    %s745 = scalar_lea.vmem [#allocation3], 17
    %v746 = vld [vmem:[%s745] ss:$2 sm:$0x3]
    %v747 = vmax.f32 %v740, %v744
    %v748 = vmax.f32 %v742, %v746
    %v751 = vrot.slane %v747, 4
    %v752 = vrot.slane %v748, 4
    %v753 = vsel %vm136, %v751, %v752
    %v756 = vsel %vm136, 0.0, %v751
    %v757 = vsel %vm209, %v753, 0.0
    %v760 = vrot.slane %v756, 1
    %v761 = vrot.slane %v757, 1
    %v762 = vsel %vm117, %v760, %v761
    %v763 = vsel %vm88, %v762, 0
    %v765 = vsel %vm88, %v761, 0
    %767 = vmatpush.msra.mxu0 0.0
    %768 = vmatpush.msra.mxu0 0.0
    %769 = vmatpush.msra.mxu0 0.0
    %770 = vmatpush.msra.mxu0 0.0
    %771 = vmatpush.msra.mxu0 0.0
    %772 = vmatpush.msra.mxu0 0.0
    %773 = vmatpush.msra.mxu0 0.0
    %774 = vmatpush.msra.mxu0 0.0
    %775 = vmatpush.msra.mxu0 0.0
    %776 = vmatpush.msra.mxu0 0.0
    %777 = vmatpush.msra.mxu0 0.0
    %778 = vmatpush.msra.mxu0 0.0
    %779 = vmatpush.msra.mxu0 0.0
    %780 = vmatpush.msra.mxu0 0.0
    %781 = vmatpush.msra.mxu0 %v58
    %782 = vmatpush.msra.mxu0 %v57
    %783 = vmatmul.f32.gmra.mxu0 %v763
    %v784 = vpop.f32.mrf.mxu0
    %v785 = vadd.f32 0.0, %v784
    %786 = vmatmul.f32.gmra.mxu0 %v765
    %v787 = vpop.f32.mrf.mxu0
    %v788 = vadd.f32 0.0, %v787
    %789 = vdwg.mxu0
    %v790 = vsel %vm88, %v756, 0
    %v792 = vsel %vm88, %v757, 0
    %794 = vmatpush.msra.mxu0 0.0
    %795 = vmatpush.msra.mxu0 0.0
    %796 = vmatpush.msra.mxu0 0.0
    %797 = vmatpush.msra.mxu0 0.0
    %798 = vmatpush.msra.mxu0 0.0
    %799 = vmatpush.msra.mxu0 0.0
    %800 = vmatpush.msra.mxu0 0.0
    %801 = vmatpush.msra.mxu0 0.0
    %802 = vmatpush.msra.mxu0 0.0
    %803 = vmatpush.msra.mxu0 0.0
    %804 = vmatpush.msra.mxu0 0.0
    %805 = vmatpush.msra.mxu0 0.0
    %806 = vmatpush.msra.mxu0 0.0
    %807 = vmatpush.msra.mxu0 0.0
    %808 = vmatpush.msra.mxu0 %v55
    %809 = vmatpush.msra.mxu0 %v54
    %810 = vmatmul.f32.gmra.mxu0 %v790
    %v811 = vpop.f32.mrf.mxu0
    %v812 = vadd.f32 %v785, %v811
    %813 = vmatmul.f32.gmra.mxu0 %v792
    %v814 = vpop.f32.mrf.mxu0
    %v815 = vadd.f32 %v788, %v814
    %816 = vdwg.mxu0
    %v817 = vrot.slane %v756, 2
    %v818 = vrot.slane %v757, 2
    %v819 = vsel %vm209, %v817, %v818
    %v820 = vsel %vm88, %v819, 0
    %v822 = vsel %vm88, %v818, 0
    %824 = vmatpush.msra.mxu0 0.0
    %825 = vmatpush.msra.mxu0 0.0
    %826 = vmatpush.msra.mxu0 0.0
    %827 = vmatpush.msra.mxu0 0.0
    %828 = vmatpush.msra.mxu0 0.0
    %829 = vmatpush.msra.mxu0 0.0
    %830 = vmatpush.msra.mxu0 0.0
    %831 = vmatpush.msra.mxu0 0.0
    %832 = vmatpush.msra.mxu0 0.0
    %833 = vmatpush.msra.mxu0 0.0
    %834 = vmatpush.msra.mxu0 0.0
    %835 = vmatpush.msra.mxu0 0.0
    %836 = vmatpush.msra.mxu0 0.0
    %837 = vmatpush.msra.mxu0 0.0
    %838 = vmatpush.msra.mxu0 %v61
    %839 = vmatpush.msra.mxu0 %v60
    %840 = vmatmul.f32.gmra.mxu0 %v820
    %v841 = vpop.f32.mrf.mxu0
    %v842 = vadd.f32 0.0, %v841
    %843 = vmatmul.f32.gmra.mxu0 %v822
    %v844 = vpop.f32.mrf.mxu0
    %v845 = vadd.f32 0.0, %v844
    %846 = vdwg.mxu0
    %v847 = vadd.f32 %v812, %v842
    %v848 = vadd.f32 %v815, %v845
    %v849 = vrot.slane %v756, 3
    %v850 = vrot.slane %v757, 3
    %v851 = vsel %vm263, %v849, %v850
    %v852 = vsel %vm88, %v851, 0
    %v854 = vsel %vm88, %v850, 0
    %856 = vmatpush.msra.mxu0 0.0
    %857 = vmatpush.msra.mxu0 0.0
    %858 = vmatpush.msra.mxu0 0.0
    %859 = vmatpush.msra.mxu0 0.0
    %860 = vmatpush.msra.mxu0 0.0
    %861 = vmatpush.msra.mxu0 0.0
    %862 = vmatpush.msra.mxu0 0.0
    %863 = vmatpush.msra.mxu0 0.0
    %864 = vmatpush.msra.mxu0 0.0
    %865 = vmatpush.msra.mxu0 0.0
    %866 = vmatpush.msra.mxu0 0.0
    %867 = vmatpush.msra.mxu0 0.0
    %868 = vmatpush.msra.mxu0 0.0
    %869 = vmatpush.msra.mxu0 0.0
    %870 = vmatpush.msra.mxu0 %v64
    %871 = vmatpush.msra.mxu0 %v63
    %872 = vmatmul.f32.gmra.mxu0 %v852
    %v873 = vpop.f32.mrf.mxu0
    %v874 = vadd.f32 0.0, %v873
    %875 = vmatmul.f32.gmra.mxu0 %v854
    %v876 = vpop.f32.mrf.mxu0
    %v877 = vadd.f32 0.0, %v876
    %878 = vdwg.mxu0
    %v879 = vadd.f32 %v847, %v874
    %v880 = vadd.f32 %v848, %v877
    %v881 = vrot.slane %v756, 4
    %v882 = vrot.slane %v757, 4
    %v883 = vsel %vm136, %v881, %v882
    %v884 = vsel %vm88, %v883, 0
    %v886 = vsel %vm88, %v882, 0
    %888 = vmatpush.msra.mxu0 0.0
    %889 = vmatpush.msra.mxu0 0.0
    %890 = vmatpush.msra.mxu0 0.0
    %891 = vmatpush.msra.mxu0 0.0
    %892 = vmatpush.msra.mxu0 0.0
    %893 = vmatpush.msra.mxu0 0.0
    %894 = vmatpush.msra.mxu0 0.0
    %895 = vmatpush.msra.mxu0 0.0
    %896 = vmatpush.msra.mxu0 0.0
    %897 = vmatpush.msra.mxu0 0.0
    %898 = vmatpush.msra.mxu0 0.0
    %899 = vmatpush.msra.mxu0 0.0
    %900 = vmatpush.msra.mxu0 0.0
    %901 = vmatpush.msra.mxu0 0.0
    %902 = vmatpush.msra.mxu0 %v67
    %903 = vmatpush.msra.mxu0 %v66
    %904 = vmatmul.f32.gmra.mxu0 %v884
    %v905 = vpop.f32.mrf.mxu0
    %v906 = vadd.f32 0.0, %v905
    %907 = vmatmul.f32.gmra.mxu0 %v886
    %v908 = vpop.f32.mrf.mxu0
    %v909 = vadd.f32 0.0, %v908
    %910 = vdwg.mxu0
    %v911 = vadd.f32 %v879, %v906
    %v912 = vadd.f32 %v880, %v909
    %v913 = vrot.slane %v756, 5
    %v914 = vrot.slane %v757, 5
    %v915 = vsel %vm602, %v913, %v914
    %v916 = vsel %vm88, %v915, 0
    %v918 = vsel %vm88, %v914, 0
    %920 = vmatpush.msra.mxu0 0.0
    %921 = vmatpush.msra.mxu0 0.0
    %922 = vmatpush.msra.mxu0 0.0
    %923 = vmatpush.msra.mxu0 0.0
    %924 = vmatpush.msra.mxu0 0.0
    %925 = vmatpush.msra.mxu0 0.0
    %926 = vmatpush.msra.mxu0 0.0
    %927 = vmatpush.msra.mxu0 0.0
    %928 = vmatpush.msra.mxu0 0.0
    %929 = vmatpush.msra.mxu0 0.0
    %930 = vmatpush.msra.mxu0 0.0
    %931 = vmatpush.msra.mxu0 0.0
    %932 = vmatpush.msra.mxu0 0.0
    %933 = vmatpush.msra.mxu0 0.0
    %934 = vmatpush.msra.mxu0 %v70
    %935 = vmatpush.msra.mxu0 %v69
    %936 = vmatmul.f32.gmra.mxu0 %v916
    %v937 = vpop.f32.mrf.mxu0
    %v938 = vadd.f32 0.0, %v937
    %939 = vmatmul.f32.gmra.mxu0 %v918
    %v940 = vpop.f32.mrf.mxu0
    %v941 = vadd.f32 0.0, %v940
    %942 = vdwg.mxu0
    %v943 = vadd.f32 %v911, %v938
    %v944 = vadd.f32 %v912, %v941
    %v945 = vrot.slane %v756, 6
    %v946 = vrot.slane %v757, 6
    %v947 = vsel %vm103, %v945, %v946
    %v948 = vrot.slane 0.0, 6
    %v949 = vsel %vm103, %v946, %v948
    %v950 = vsel %vm88, %v947, 0
    %v952 = vsel %vm88, %v949, 0
    %954 = vmatpush.msra.mxu0 0.0
    %955 = vmatpush.msra.mxu0 0.0
    %956 = vmatpush.msra.mxu0 0.0
    %957 = vmatpush.msra.mxu0 0.0
    %958 = vmatpush.msra.mxu0 0.0
    %959 = vmatpush.msra.mxu0 0.0
    %960 = vmatpush.msra.mxu0 0.0
    %961 = vmatpush.msra.mxu0 0.0
    %962 = vmatpush.msra.mxu0 0.0
    %963 = vmatpush.msra.mxu0 0.0
    %964 = vmatpush.msra.mxu0 0.0
    %965 = vmatpush.msra.mxu0 0.0
    %966 = vmatpush.msra.mxu0 0.0
    %967 = vmatpush.msra.mxu0 0.0
    %968 = vmatpush.msra.mxu0 %v73
    %969 = vmatpush.msra.mxu0 %v72
    %970 = vmatmul.f32.gmra.mxu0 %v950
    %v971 = vpop.f32.mrf.mxu0
    %v972 = vadd.f32 0.0, %v971
    %973 = vmatmul.f32.gmra.mxu0 %v952
    %v974 = vpop.f32.mrf.mxu0
    %v975 = vadd.f32 0.0, %v974
    %976 = vdwg.mxu0
    %v977 = vadd.f32 %v943, %v972
    %v978 = vadd.f32 %v944, %v975
    %v979 = vrot.slane %v756, 7
    %v980 = vrot.slane %v757, 7
    %v981 = vsel %vm684, %v979, %v980
    %v982 = vsel %vm684, %v980, %v690
    %v983 = vsel %vm88, %v981, 0
    %v985 = vsel %vm88, %v982, 0
    %987 = vmatpush.msra.mxu0 0.0
    %988 = vmatpush.msra.mxu0 0.0
    %989 = vmatpush.msra.mxu0 0.0
    %990 = vmatpush.msra.mxu0 0.0
    %991 = vmatpush.msra.mxu0 0.0
    %992 = vmatpush.msra.mxu0 0.0
    %993 = vmatpush.msra.mxu0 0.0
    %994 = vmatpush.msra.mxu0 0.0
    %995 = vmatpush.msra.mxu0 0.0
    %996 = vmatpush.msra.mxu0 0.0
    %997 = vmatpush.msra.mxu0 0.0
    %998 = vmatpush.msra.mxu0 0.0
    %999 = vmatpush.msra.mxu0 0.0
    %1000 = vmatpush.msra.mxu0 0.0
    %1001 = vmatpush.msra.mxu0 %v76
    %1002 = vmatpush.msra.mxu0 %v75
    %1003 = vmatmul.f32.gmra.mxu0 %v983
    %v1004 = vpop.f32.mrf.mxu0
    %v1005 = vadd.f32 0.0, %v1004
    %1006 = vmatmul.f32.gmra.mxu0 %v985
    %v1007 = vpop.f32.mrf.mxu0
    %v1008 = vadd.f32 0.0, %v1007
    %1009 = vdwg.mxu0
    %v1010 = vadd.f32 %v977, %v1005
    %v1011 = vadd.f32 %v978, %v1008
    %v1013 = vperm.slane %v79, 0
    %v1015 = vadd.f32 %v1010, %v1013
    %v1016 = vadd.f32 %v1011, %v1013
    %v1017 = vmax.f32 %v1015, 0.0
    %v1018 = vmax.f32 %v1016, 0.0
    %1019 = vst.msk [vmem:[#allocation4 + $0x1] sm:$0xff] %vm88, %v1017
    %vm1020 = vcmask 124928
    %1021 = vst.msk [vmem:[#allocation4 + $0x9] sm:$0x7] %vm1020, %v1018
    %v1022 = vld [vmem:[#allocation4] ss:$2 sm:$0x3f]
    %s1023 = scalar_lea.vmem [#allocation4], 1
    %v1024 = vld [vmem:[%s1023] ss:$2 sm:$0x3f]
    %v1025 = vmax.f32 %v1022, %v1024
    %vm1026 = vcmask 48128
    %v1028 = vsel %vm1026, %v80, 0
    %v1031 = vsel %vm209, %v1025, 0
    %1033 = vmatpush.msra.mxu0 0.0
    %1034 = vmatpush.msra.mxu0 0.0
    %1035 = vmatpush.msra.mxu0 0.0
    %1036 = vmatpush.msra.mxu0 0.0
    %1037 = vmatpush.msra.mxu0 0.0
    %1038 = vmatpush.msra.mxu0 0.0
    %1039 = vmatpush.msra.mxu0 0.0
    %1040 = vmatpush.msra.mxu0 0.0
    %1041 = vmatpush.msra.mxu0 0.0
    %1042 = vmatpush.msra.mxu0 0.0
    %1043 = vmatpush.msra.mxu0 0.0
    %1044 = vmatpush.msra.mxu0 0.0
    %1045 = vmatpush.msra.mxu0 0.0
    %1046 = vmatpush.msra.mxu0 0.0
    %1047 = vmatpush.msra.mxu0 0.0
    %1048 = vmatpush.msra.mxu0 %v1031
    %1049 = vmatmul.f32.gmra.mxu0 %v1028
    %v1050 = vpop.f32.mrf.mxu0
    %v1051 = vadd.f32 0.0, %v1050
    %1052 = vdwg.mxu0
    %1053 = vst.msk [vmem:[#allocation5] sm:$0xf] %vm91, %v1051
    %s1054 = scalar_lea.vmem %s0, 32
    %v1055 = vld [vmem:[%s1054] sm:$0xff]
    %v1056 = vld [vmem:[%s1054 + $0x8] sm:$0xff]
    %v1057 = vld [vmem:[%s1054 + $0x10] sm:$0xff]
    %v1058 = vld [vmem:[%s1054 + $0x18] sm:$0xff]
    %v1063 = vrot.slane %v1055, 6
    %v1064 = vrot.slane %v1056, 6
    %v1065 = vsel %vm103, %v1063, %v1064
    %v1066 = vrot.slane %v1057, 6
    %v1067 = vsel %vm103, %v1064, %v1066
    %v1068 = vrot.slane %v1058, 6
    %v1069 = vsel %vm103, %v1066, %v1068
    %v1072 = vsel %vm103, 0.0, %v1063
    %v1073 = vsel %vm103, %v1068, 0.0
    %v1076 = vrot.slane %v1072, 1
    %v1077 = vrot.slane %v1065, 1
    %v1078 = vsel %vm117, %v1076, %v1077
    %v1079 = vrot.slane %v1067, 1
    %v1080 = vsel %vm117, %v1077, %v1079
    %v1081 = vrot.slane %v1069, 1
    %v1082 = vsel %vm117, %v1079, %v1081
    %v1083 = vrot.slane %v1073, 1
    %v1084 = vsel %vm117, %v1081, %v1083
    %v1085 = vsel %vm127, %v1078, 0
    %v1087 = vsel %vm127, %v1080, 0
    %v1089 = vsel %vm127, %v1082, 0
    %v1091 = vsel %vm127, %v1084, 0
    %1093 = vmatpush.msra.mxu0 0.0
    %1094 = vmatpush.msra.mxu0 0.0
    %1095 = vmatpush.msra.mxu0 0.0
    %1096 = vmatpush.msra.mxu0 0.0
    %1097 = vmatpush.msra.mxu0 0.0
    %1098 = vmatpush.msra.mxu0 0.0
    %1099 = vmatpush.msra.mxu0 0.0
    %1100 = vmatpush.msra.mxu0 0.0
    %1101 = vmatpush.msra.mxu0 0.0
    %1102 = vmatpush.msra.mxu0 0.0
    %1103 = vmatpush.msra.mxu0 0.0
    %1104 = vmatpush.msra.mxu0 0.0
    %1105 = vmatpush.msra.mxu0 0.0
    %1106 = vmatpush.msra.mxu0 0.0
    %1107 = vmatpush.msra.mxu0 0.0
    %1108 = vmatpush.msra.mxu0 %v138
    %1109 = vmatmul.f32.gmra.mxu0 %v1085
    %v1110 = vpop.f32.mrf.mxu0
    %v1111 = vadd.f32 0.0, %v1110
    %1112 = vmatmul.f32.gmra.mxu0 %v1087
    %v1113 = vpop.f32.mrf.mxu0
    %v1114 = vadd.f32 0.0, %v1113
    %1115 = vmatmul.f32.gmra.mxu0 %v1089
    %v1116 = vpop.f32.mrf.mxu0
    %v1117 = vadd.f32 0.0, %v1116
    %1118 = vmatmul.f32.gmra.mxu0 %v1091
    %v1119 = vpop.f32.mrf.mxu0
    %v1120 = vadd.f32 0.0, %v1119
    %1121 = vdwg.mxu0
    %v1122 = vsel %vm127, %v1072, 0
    %v1124 = vsel %vm127, %v1065, 0
    %v1126 = vsel %vm127, %v1067, 0
    %v1128 = vsel %vm127, %v1069, 0
    %1130 = vmatpush.msra.mxu0 0.0
    %1131 = vmatpush.msra.mxu0 0.0
    %1132 = vmatpush.msra.mxu0 0.0
    %1133 = vmatpush.msra.mxu0 0.0
    %1134 = vmatpush.msra.mxu0 0.0
    %1135 = vmatpush.msra.mxu0 0.0
    %1136 = vmatpush.msra.mxu0 0.0
    %1137 = vmatpush.msra.mxu0 0.0
    %1138 = vmatpush.msra.mxu0 0.0
    %1139 = vmatpush.msra.mxu0 0.0
    %1140 = vmatpush.msra.mxu0 0.0
    %1141 = vmatpush.msra.mxu0 0.0
    %1142 = vmatpush.msra.mxu0 0.0
    %1143 = vmatpush.msra.mxu0 0.0
    %1144 = vmatpush.msra.mxu0 0.0
    %1145 = vmatpush.msra.mxu0 %v178
    %1146 = vmatmul.f32.gmra.mxu0 %v1122
    %v1147 = vpop.f32.mrf.mxu0
    %v1148 = vadd.f32 %v1111, %v1147
    %1149 = vmatmul.f32.gmra.mxu0 %v1124
    %v1150 = vpop.f32.mrf.mxu0
    %v1151 = vadd.f32 %v1114, %v1150
    %1152 = vmatmul.f32.gmra.mxu0 %v1126
    %v1153 = vpop.f32.mrf.mxu0
    %v1154 = vadd.f32 %v1117, %v1153
    %1155 = vmatmul.f32.gmra.mxu0 %v1128
    %v1156 = vpop.f32.mrf.mxu0
    %v1157 = vadd.f32 %v1120, %v1156
    %1158 = vdwg.mxu0
    %v1159 = vrot.slane %v1072, 2
    %v1160 = vrot.slane %v1065, 2
    %v1161 = vsel %vm209, %v1159, %v1160
    %v1162 = vrot.slane %v1067, 2
    %v1163 = vsel %vm209, %v1160, %v1162
    %v1164 = vrot.slane %v1069, 2
    %v1165 = vsel %vm209, %v1162, %v1164
    %v1166 = vrot.slane %v1073, 2
    %v1167 = vsel %vm209, %v1164, %v1166
    %v1168 = vsel %vm127, %v1161, 0
    %v1170 = vsel %vm127, %v1163, 0
    %v1172 = vsel %vm127, %v1165, 0
    %v1174 = vsel %vm127, %v1167, 0
    %1176 = vmatpush.msra.mxu0 0.0
    %1177 = vmatpush.msra.mxu0 0.0
    %1178 = vmatpush.msra.mxu0 0.0
    %1179 = vmatpush.msra.mxu0 0.0
    %1180 = vmatpush.msra.mxu0 0.0
    %1181 = vmatpush.msra.mxu0 0.0
    %1182 = vmatpush.msra.mxu0 0.0
    %1183 = vmatpush.msra.mxu0 0.0
    %1184 = vmatpush.msra.mxu0 0.0
    %1185 = vmatpush.msra.mxu0 0.0
    %1186 = vmatpush.msra.mxu0 0.0
    %1187 = vmatpush.msra.mxu0 0.0
    %1188 = vmatpush.msra.mxu0 0.0
    %1189 = vmatpush.msra.mxu0 0.0
    %1190 = vmatpush.msra.mxu0 0.0
    %1191 = vmatpush.msra.mxu0 %v228
    %1192 = vmatmul.f32.gmra.mxu0 %v1168
    %v1193 = vpop.f32.mrf.mxu0
    %v1194 = vadd.f32 0.0, %v1193
    %1195 = vmatmul.f32.gmra.mxu0 %v1170
    %v1196 = vpop.f32.mrf.mxu0
    %v1197 = vadd.f32 0.0, %v1196
    %1198 = vmatmul.f32.gmra.mxu0 %v1172
    %v1199 = vpop.f32.mrf.mxu0
    %v1200 = vadd.f32 0.0, %v1199
    %1201 = vmatmul.f32.gmra.mxu0 %v1174
    %v1202 = vpop.f32.mrf.mxu0
    %v1203 = vadd.f32 0.0, %v1202
    %1204 = vdwg.mxu0
    %v1205 = vadd.f32 %v1148, %v1194
    %v1206 = vadd.f32 %v1151, %v1197
    %v1207 = vadd.f32 %v1154, %v1200
    %v1208 = vadd.f32 %v1157, %v1203
    %v1209 = vrot.slane %v1072, 3
    %v1210 = vrot.slane %v1065, 3
    %v1211 = vsel %vm263, %v1209, %v1210
    %v1212 = vrot.slane %v1067, 3
    %v1213 = vsel %vm263, %v1210, %v1212
    %v1214 = vrot.slane %v1069, 3
    %v1215 = vsel %vm263, %v1212, %v1214
    %v1216 = vrot.slane %v1073, 3
    %v1217 = vsel %vm263, %v1214, %v1216
    %v1218 = vsel %vm127, %v1211, 0
    %v1220 = vsel %vm127, %v1213, 0
    %v1222 = vsel %vm127, %v1215, 0
    %v1224 = vsel %vm127, %v1217, 0
    %1226 = vmatpush.msra.mxu0 0.0
    %1227 = vmatpush.msra.mxu0 0.0
    %1228 = vmatpush.msra.mxu0 0.0
    %1229 = vmatpush.msra.mxu0 0.0
    %1230 = vmatpush.msra.mxu0 0.0
    %1231 = vmatpush.msra.mxu0 0.0
    %1232 = vmatpush.msra.mxu0 0.0
    %1233 = vmatpush.msra.mxu0 0.0
    %1234 = vmatpush.msra.mxu0 0.0
    %1235 = vmatpush.msra.mxu0 0.0
    %1236 = vmatpush.msra.mxu0 0.0
    %1237 = vmatpush.msra.mxu0 0.0
    %1238 = vmatpush.msra.mxu0 0.0
    %1239 = vmatpush.msra.mxu0 0.0
    %1240 = vmatpush.msra.mxu0 0.0
    %1241 = vmatpush.msra.mxu0 %v282
    %1242 = vmatmul.f32.gmra.mxu0 %v1218
    %v1243 = vpop.f32.mrf.mxu0
    %v1244 = vadd.f32 0.0, %v1243
    %1245 = vmatmul.f32.gmra.mxu0 %v1220
    %v1246 = vpop.f32.mrf.mxu0
    %v1247 = vadd.f32 0.0, %v1246
    %1248 = vmatmul.f32.gmra.mxu0 %v1222
    %v1249 = vpop.f32.mrf.mxu0
    %v1250 = vadd.f32 0.0, %v1249
    %1251 = vmatmul.f32.gmra.mxu0 %v1224
    %v1252 = vpop.f32.mrf.mxu0
    %v1253 = vadd.f32 0.0, %v1252
    %1254 = vdwg.mxu0
    %v1255 = vadd.f32 %v1205, %v1244
    %v1256 = vadd.f32 %v1206, %v1247
    %v1257 = vadd.f32 %v1207, %v1250
    %v1258 = vadd.f32 %v1208, %v1253
    %v1259 = vrot.slane %v1072, 4
    %v1260 = vrot.slane %v1065, 4
    %v1261 = vsel %vm136, %v1259, %v1260
    %v1262 = vrot.slane %v1067, 4
    %v1263 = vsel %vm136, %v1260, %v1262
    %v1264 = vrot.slane %v1069, 4
    %v1265 = vsel %vm136, %v1262, %v1264
    %v1266 = vrot.slane %v1073, 4
    %v1267 = vsel %vm136, %v1264, %v1266
    %v1268 = vsel %vm127, %v1261, 0
    %v1270 = vsel %vm127, %v1263, 0
    %v1272 = vsel %vm127, %v1265, 0
    %v1274 = vsel %vm127, %v1267, 0
    %1276 = vmatpush.msra.mxu0 0.0
    %1277 = vmatpush.msra.mxu0 0.0
    %1278 = vmatpush.msra.mxu0 0.0
    %1279 = vmatpush.msra.mxu0 0.0
    %1280 = vmatpush.msra.mxu0 0.0
    %1281 = vmatpush.msra.mxu0 0.0
    %1282 = vmatpush.msra.mxu0 0.0
    %1283 = vmatpush.msra.mxu0 0.0
    %1284 = vmatpush.msra.mxu0 0.0
    %1285 = vmatpush.msra.mxu0 0.0
    %1286 = vmatpush.msra.mxu0 0.0
    %1287 = vmatpush.msra.mxu0 0.0
    %1288 = vmatpush.msra.mxu0 0.0
    %1289 = vmatpush.msra.mxu0 0.0
    %1290 = vmatpush.msra.mxu0 0.0
    %1291 = vmatpush.msra.mxu0 %v335
    %1292 = vmatmul.f32.gmra.mxu0 %v1268
    %v1293 = vpop.f32.mrf.mxu0
    %v1294 = vadd.f32 0.0, %v1293
    %1295 = vmatmul.f32.gmra.mxu0 %v1270
    %v1296 = vpop.f32.mrf.mxu0
    %v1297 = vadd.f32 0.0, %v1296
    %1298 = vmatmul.f32.gmra.mxu0 %v1272
    %v1299 = vpop.f32.mrf.mxu0
    %v1300 = vadd.f32 0.0, %v1299
    %1301 = vmatmul.f32.gmra.mxu0 %v1274
    %v1302 = vpop.f32.mrf.mxu0
    %v1303 = vadd.f32 0.0, %v1302
    %1304 = vdwg.mxu0
    %v1305 = vadd.f32 %v1255, %v1294
    %v1306 = vadd.f32 %v1256, %v1297
    %v1307 = vadd.f32 %v1257, %v1300
    %v1308 = vadd.f32 %v1258, %v1303
    %v1309 = vadd.f32 %v1305, %v371
    %v1310 = vadd.f32 %v1306, %v371
    %v1311 = vadd.f32 %v1307, %v371
    %v1312 = vadd.f32 %v1308, %v371
    %v1313 = vmax.f32 %v1309, 0.0
    %v1314 = vmax.f32 %v1310, 0.0
    %v1315 = vmax.f32 %v1311, 0.0
    %v1316 = vmax.f32 %v1312, 0.0
    %1317 = vst.msk [vmem:[#allocation2 + $0x1] sm:$0xff] %vm81, %v1313
    %1318 = vst.msk [vmem:[#allocation2 + $0x9] sm:$0xff] %vm81, %v1314
    %1319 = vst.msk [vmem:[#allocation2 + $0x11] sm:$0xff] %vm81, %v1315
    %1320 = vst.msk [vmem:[#allocation2 + $0x19] sm:$0xff] %vm81, %v1316
    %v1321 = vld [vmem:[#allocation2] ss:$2 sm:$0xff]
    %v1322 = vld [vmem:[%s386] ss:$2 sm:$0xff]
    %v1323 = vld [vmem:[%s388] ss:$2 sm:$0x1]
    %v1324 = vld [vmem:[%s390] ss:$2 sm:$0xff]
    %v1325 = vld [vmem:[%s392] ss:$2 sm:$0xff]
    %v1326 = vld [vmem:[%s394] ss:$2 sm:$0x1]
    %v1327 = vmax.f32 %v1321, %v1324
    %v1328 = vmax.f32 %v1322, %v1325
    %v1329 = vmax.f32 %v1323, %v1326
    %v1333 = vrot.slane %v1327, 4
    %v1334 = vrot.slane %v1328, 4
    %v1335 = vsel %vm136, %v1333, %v1334
    %v1336 = vrot.slane %v1329, 4
    %v1337 = vsel %vm136, %v1334, %v1336
    %v1340 = vsel %vm136, 0.0, %v1333
    %v1341 = vsel %vm263, %v1337, 0.0
    %v1344 = vrot.slane %v1340, 1
    %v1345 = vrot.slane %v1335, 1
    %v1346 = vsel %vm117, %v1344, %v1345
    %v1347 = vrot.slane %v1341, 1
    %v1348 = vsel %vm117, %v1345, %v1347
    %v1349 = vsel %vm81, %v1346, 0
    %v1351 = vsel %vm81, %v1348, 0
    %v1353 = vsel %vm81, %v1347, 0
    %1355 = vmatpush.msra.mxu0 0.0
    %1356 = vmatpush.msra.mxu0 0.0
    %1357 = vmatpush.msra.mxu0 0.0
    %1358 = vmatpush.msra.mxu0 0.0
    %1359 = vmatpush.msra.mxu0 0.0
    %1360 = vmatpush.msra.mxu0 0.0
    %1361 = vmatpush.msra.mxu0 0.0
    %1362 = vmatpush.msra.mxu0 0.0
    %1363 = vmatpush.msra.mxu0 0.0
    %1364 = vmatpush.msra.mxu0 0.0
    %1365 = vmatpush.msra.mxu0 0.0
    %1366 = vmatpush.msra.mxu0 0.0
    %1367 = vmatpush.msra.mxu0 0.0
    %1368 = vmatpush.msra.mxu0 0.0
    %1369 = vmatpush.msra.mxu0 0.0
    %1370 = vmatpush.msra.mxu0 %v41
    %1371 = vmatmul.f32.gmra.mxu0 %v1349
    %v1372 = vpop.f32.mrf.mxu0
    %v1373 = vadd.f32 0.0, %v1372
    %1374 = vmatmul.f32.gmra.mxu0 %v1351
    %v1375 = vpop.f32.mrf.mxu0
    %v1376 = vadd.f32 0.0, %v1375
    %1377 = vmatmul.f32.gmra.mxu0 %v1353
    %v1378 = vpop.f32.mrf.mxu0
    %v1379 = vadd.f32 0.0, %v1378
    %1380 = vdwg.mxu0
    %v1381 = vsel %vm81, %v1340, 0
    %v1383 = vsel %vm81, %v1335, 0
    %v1385 = vsel %vm81, %v1341, 0
    %1387 = vmatpush.msra.mxu0 0.0
    %1388 = vmatpush.msra.mxu0 0.0
    %1389 = vmatpush.msra.mxu0 0.0
    %1390 = vmatpush.msra.mxu0 0.0
    %1391 = vmatpush.msra.mxu0 0.0
    %1392 = vmatpush.msra.mxu0 0.0
    %1393 = vmatpush.msra.mxu0 0.0
    %1394 = vmatpush.msra.mxu0 0.0
    %1395 = vmatpush.msra.mxu0 0.0
    %1396 = vmatpush.msra.mxu0 0.0
    %1397 = vmatpush.msra.mxu0 0.0
    %1398 = vmatpush.msra.mxu0 0.0
    %1399 = vmatpush.msra.mxu0 0.0
    %1400 = vmatpush.msra.mxu0 0.0
    %1401 = vmatpush.msra.mxu0 0.0
    %1402 = vmatpush.msra.mxu0 %v39
    %1403 = vmatmul.f32.gmra.mxu0 %v1381
    %v1404 = vpop.f32.mrf.mxu0
    %v1405 = vadd.f32 %v1373, %v1404
    %1406 = vmatmul.f32.gmra.mxu0 %v1383
    %v1407 = vpop.f32.mrf.mxu0
    %v1408 = vadd.f32 %v1376, %v1407
    %1409 = vmatmul.f32.gmra.mxu0 %v1385
    %v1410 = vpop.f32.mrf.mxu0
    %v1411 = vadd.f32 %v1379, %v1410
    %1412 = vdwg.mxu0
    %v1413 = vrot.slane %v1340, 2
    %v1414 = vrot.slane %v1335, 2
    %v1415 = vsel %vm209, %v1413, %v1414
    %v1416 = vrot.slane %v1341, 2
    %v1417 = vsel %vm209, %v1414, %v1416
    %v1418 = vsel %vm81, %v1415, 0
    %v1420 = vsel %vm81, %v1417, 0
    %v1422 = vsel %vm81, %v1416, 0
    %1424 = vmatpush.msra.mxu0 0.0
    %1425 = vmatpush.msra.mxu0 0.0
    %1426 = vmatpush.msra.mxu0 0.0
    %1427 = vmatpush.msra.mxu0 0.0
    %1428 = vmatpush.msra.mxu0 0.0
    %1429 = vmatpush.msra.mxu0 0.0
    %1430 = vmatpush.msra.mxu0 0.0
    %1431 = vmatpush.msra.mxu0 0.0
    %1432 = vmatpush.msra.mxu0 0.0
    %1433 = vmatpush.msra.mxu0 0.0
    %1434 = vmatpush.msra.mxu0 0.0
    %1435 = vmatpush.msra.mxu0 0.0
    %1436 = vmatpush.msra.mxu0 0.0
    %1437 = vmatpush.msra.mxu0 0.0
    %1438 = vmatpush.msra.mxu0 0.0
    %1439 = vmatpush.msra.mxu0 %v43
    %1440 = vmatmul.f32.gmra.mxu0 %v1418
    %v1441 = vpop.f32.mrf.mxu0
    %v1442 = vadd.f32 0.0, %v1441
    %1443 = vmatmul.f32.gmra.mxu0 %v1420
    %v1444 = vpop.f32.mrf.mxu0
    %v1445 = vadd.f32 0.0, %v1444
    %1446 = vmatmul.f32.gmra.mxu0 %v1422
    %v1447 = vpop.f32.mrf.mxu0
    %v1448 = vadd.f32 0.0, %v1447
    %1449 = vdwg.mxu0
    %v1450 = vadd.f32 %v1405, %v1442
    %v1451 = vadd.f32 %v1408, %v1445
    %v1452 = vadd.f32 %v1411, %v1448
    %v1453 = vrot.slane %v1340, 3
    %v1454 = vrot.slane %v1335, 3
    %v1455 = vsel %vm263, %v1453, %v1454
    %v1456 = vrot.slane %v1341, 3
    %v1457 = vsel %vm263, %v1454, %v1456
    %v1458 = vsel %vm81, %v1455, 0
    %v1460 = vsel %vm81, %v1457, 0
    %v1462 = vsel %vm81, %v1456, 0
    %1464 = vmatpush.msra.mxu0 0.0
    %1465 = vmatpush.msra.mxu0 0.0
    %1466 = vmatpush.msra.mxu0 0.0
    %1467 = vmatpush.msra.mxu0 0.0
    %1468 = vmatpush.msra.mxu0 0.0
    %1469 = vmatpush.msra.mxu0 0.0
    %1470 = vmatpush.msra.mxu0 0.0
    %1471 = vmatpush.msra.mxu0 0.0
    %1472 = vmatpush.msra.mxu0 0.0
    %1473 = vmatpush.msra.mxu0 0.0
    %1474 = vmatpush.msra.mxu0 0.0
    %1475 = vmatpush.msra.mxu0 0.0
    %1476 = vmatpush.msra.mxu0 0.0
    %1477 = vmatpush.msra.mxu0 0.0
    %1478 = vmatpush.msra.mxu0 0.0
    %1479 = vmatpush.msra.mxu0 %v45
    %1480 = vmatmul.f32.gmra.mxu0 %v1458
    %v1481 = vpop.f32.mrf.mxu0
    %v1482 = vadd.f32 0.0, %v1481
    %1483 = vmatmul.f32.gmra.mxu0 %v1460
    %v1484 = vpop.f32.mrf.mxu0
    %v1485 = vadd.f32 0.0, %v1484
    %1486 = vmatmul.f32.gmra.mxu0 %v1462
    %v1487 = vpop.f32.mrf.mxu0
    %v1488 = vadd.f32 0.0, %v1487
    %1489 = vdwg.mxu0
    %v1490 = vadd.f32 %v1450, %v1482
    %v1491 = vadd.f32 %v1451, %v1485
    %v1492 = vadd.f32 %v1452, %v1488
    %v1493 = vrot.slane %v1340, 4
    %v1494 = vrot.slane %v1335, 4
    %v1495 = vsel %vm136, %v1493, %v1494
    %v1496 = vrot.slane %v1341, 4
    %v1497 = vsel %vm136, %v1494, %v1496
    %v1498 = vsel %vm81, %v1495, 0
    %v1500 = vsel %vm81, %v1497, 0
    %v1502 = vsel %vm81, %v1496, 0
    %1504 = vmatpush.msra.mxu0 0.0
    %1505 = vmatpush.msra.mxu0 0.0
    %1506 = vmatpush.msra.mxu0 0.0
    %1507 = vmatpush.msra.mxu0 0.0
    %1508 = vmatpush.msra.mxu0 0.0
    %1509 = vmatpush.msra.mxu0 0.0
    %1510 = vmatpush.msra.mxu0 0.0
    %1511 = vmatpush.msra.mxu0 0.0
    %1512 = vmatpush.msra.mxu0 0.0
    %1513 = vmatpush.msra.mxu0 0.0
    %1514 = vmatpush.msra.mxu0 0.0
    %1515 = vmatpush.msra.mxu0 0.0
    %1516 = vmatpush.msra.mxu0 0.0
    %1517 = vmatpush.msra.mxu0 0.0
    %1518 = vmatpush.msra.mxu0 0.0
    %1519 = vmatpush.msra.mxu0 %v47
    %1520 = vmatmul.f32.gmra.mxu0 %v1498
    %v1521 = vpop.f32.mrf.mxu0
    %v1522 = vadd.f32 0.0, %v1521
    %1523 = vmatmul.f32.gmra.mxu0 %v1500
    %v1524 = vpop.f32.mrf.mxu0
    %v1525 = vadd.f32 0.0, %v1524
    %1526 = vmatmul.f32.gmra.mxu0 %v1502
    %v1527 = vpop.f32.mrf.mxu0
    %v1528 = vadd.f32 0.0, %v1527
    %1529 = vdwg.mxu0
    %v1530 = vadd.f32 %v1490, %v1522
    %v1531 = vadd.f32 %v1491, %v1525
    %v1532 = vadd.f32 %v1492, %v1528
    %v1533 = vrot.slane %v1340, 5
    %v1534 = vrot.slane %v1335, 5
    %v1535 = vsel %vm602, %v1533, %v1534
    %v1536 = vrot.slane %v1341, 5
    %v1537 = vsel %vm602, %v1534, %v1536
    %v1538 = vsel %vm81, %v1535, 0
    %v1540 = vsel %vm81, %v1537, 0
    %v1542 = vsel %vm81, %v1536, 0
    %1544 = vmatpush.msra.mxu0 0.0
    %1545 = vmatpush.msra.mxu0 0.0
    %1546 = vmatpush.msra.mxu0 0.0
    %1547 = vmatpush.msra.mxu0 0.0
    %1548 = vmatpush.msra.mxu0 0.0
    %1549 = vmatpush.msra.mxu0 0.0
    %1550 = vmatpush.msra.mxu0 0.0
    %1551 = vmatpush.msra.mxu0 0.0
    %1552 = vmatpush.msra.mxu0 0.0
    %1553 = vmatpush.msra.mxu0 0.0
    %1554 = vmatpush.msra.mxu0 0.0
    %1555 = vmatpush.msra.mxu0 0.0
    %1556 = vmatpush.msra.mxu0 0.0
    %1557 = vmatpush.msra.mxu0 0.0
    %1558 = vmatpush.msra.mxu0 0.0
    %1559 = vmatpush.msra.mxu0 %v49
    %1560 = vmatmul.f32.gmra.mxu0 %v1538
    %v1561 = vpop.f32.mrf.mxu0
    %v1562 = vadd.f32 0.0, %v1561
    %1563 = vmatmul.f32.gmra.mxu0 %v1540
    %v1564 = vpop.f32.mrf.mxu0
    %v1565 = vadd.f32 0.0, %v1564
    %1566 = vmatmul.f32.gmra.mxu0 %v1542
    %v1567 = vpop.f32.mrf.mxu0
    %v1568 = vadd.f32 0.0, %v1567
    %1569 = vdwg.mxu0
    %v1570 = vadd.f32 %v1530, %v1562
    %v1571 = vadd.f32 %v1531, %v1565
    %v1572 = vadd.f32 %v1532, %v1568
    %v1573 = vrot.slane %v1340, 6
    %v1574 = vrot.slane %v1335, 6
    %v1575 = vsel %vm103, %v1573, %v1574
    %v1576 = vrot.slane %v1341, 6
    %v1577 = vsel %vm103, %v1574, %v1576
    %v1578 = vsel %vm81, %v1575, 0
    %v1580 = vsel %vm81, %v1577, 0
    %v1582 = vsel %vm81, %v1576, 0
    %1584 = vmatpush.msra.mxu0 0.0
    %1585 = vmatpush.msra.mxu0 0.0
    %1586 = vmatpush.msra.mxu0 0.0
    %1587 = vmatpush.msra.mxu0 0.0
    %1588 = vmatpush.msra.mxu0 0.0
    %1589 = vmatpush.msra.mxu0 0.0
    %1590 = vmatpush.msra.mxu0 0.0
    %1591 = vmatpush.msra.mxu0 0.0
    %1592 = vmatpush.msra.mxu0 0.0
    %1593 = vmatpush.msra.mxu0 0.0
    %1594 = vmatpush.msra.mxu0 0.0
    %1595 = vmatpush.msra.mxu0 0.0
    %1596 = vmatpush.msra.mxu0 0.0
    %1597 = vmatpush.msra.mxu0 0.0
    %1598 = vmatpush.msra.mxu0 0.0
    %1599 = vmatpush.msra.mxu0 %v51
    %1600 = vmatmul.f32.gmra.mxu0 %v1578
    %v1601 = vpop.f32.mrf.mxu0
    %v1602 = vadd.f32 0.0, %v1601
    %1603 = vmatmul.f32.gmra.mxu0 %v1580
    %v1604 = vpop.f32.mrf.mxu0
    %v1605 = vadd.f32 0.0, %v1604
    %1606 = vmatmul.f32.gmra.mxu0 %v1582
    %v1607 = vpop.f32.mrf.mxu0
    %v1608 = vadd.f32 0.0, %v1607
    %1609 = vdwg.mxu0
    %v1610 = vadd.f32 %v1570, %v1602
    %v1611 = vadd.f32 %v1571, %v1605
    %v1612 = vadd.f32 %v1572, %v1608
    %v1613 = vrot.slane %v1340, 7
    %v1614 = vrot.slane %v1335, 7
    %v1615 = vsel %vm684, %v1613, %v1614
    %v1616 = vrot.slane %v1341, 7
    %v1617 = vsel %vm684, %v1614, %v1616
    %v1618 = vsel %vm684, %v1616, %v690
    %v1619 = vsel %vm81, %v1615, 0
    %v1621 = vsel %vm81, %v1617, 0
    %v1623 = vsel %vm81, %v1618, 0
    %1625 = vmatpush.msra.mxu0 0.0
    %1626 = vmatpush.msra.mxu0 0.0
    %1627 = vmatpush.msra.mxu0 0.0
    %1628 = vmatpush.msra.mxu0 0.0
    %1629 = vmatpush.msra.mxu0 0.0
    %1630 = vmatpush.msra.mxu0 0.0
    %1631 = vmatpush.msra.mxu0 0.0
    %1632 = vmatpush.msra.mxu0 0.0
    %1633 = vmatpush.msra.mxu0 0.0
    %1634 = vmatpush.msra.mxu0 0.0
    %1635 = vmatpush.msra.mxu0 0.0
    %1636 = vmatpush.msra.mxu0 0.0
    %1637 = vmatpush.msra.mxu0 0.0
    %1638 = vmatpush.msra.mxu0 0.0
    %1639 = vmatpush.msra.mxu0 0.0
    %1640 = vmatpush.msra.mxu0 %v53
    %1641 = vmatmul.f32.gmra.mxu0 %v1619
    %v1642 = vpop.f32.mrf.mxu0
    %v1643 = vadd.f32 0.0, %v1642
    %1644 = vmatmul.f32.gmra.mxu0 %v1621
    %v1645 = vpop.f32.mrf.mxu0
    %v1646 = vadd.f32 0.0, %v1645
    %1647 = vmatmul.f32.gmra.mxu0 %v1623
    %v1648 = vpop.f32.mrf.mxu0
    %v1649 = vadd.f32 0.0, %v1648
    %1650 = vdwg.mxu0
    %v1651 = vadd.f32 %v1610, %v1643
    %v1652 = vadd.f32 %v1611, %v1646
    %v1653 = vadd.f32 %v1612, %v1649
    %v1654 = vadd.f32 %v1651, %v728
    %v1655 = vadd.f32 %v1652, %v728
    %v1656 = vadd.f32 %v1653, %v728
    %v1657 = vmax.f32 %v1654, 0.0
    %v1658 = vmax.f32 %v1655, 0.0
    %v1659 = vmax.f32 %v1656, 0.0
    %1660 = vst.msk [vmem:[#allocation3 + $0x1] sm:$0xff] %vm88, %v1657
    %1661 = vst.msk [vmem:[#allocation3 + $0x9] sm:$0xff] %vm88, %v1658
    %1662 = vst.msk [vmem:[#allocation3 + $0x11] sm:$0x3] %vm738, %v1659
    %v1663 = vld [vmem:[#allocation3] ss:$2 sm:$0xff]
    %v1664 = vld [vmem:[%s741] ss:$2 sm:$0x3]
    %v1665 = vld [vmem:[%s743] ss:$2 sm:$0xff]
    %v1666 = vld [vmem:[%s745] ss:$2 sm:$0x3]
    %v1667 = vmax.f32 %v1663, %v1665
    %v1668 = vmax.f32 %v1664, %v1666
    %v1671 = vrot.slane %v1667, 4
    %v1672 = vrot.slane %v1668, 4
    %v1673 = vsel %vm136, %v1671, %v1672
    %v1676 = vsel %vm136, 0.0, %v1671
    %v1677 = vsel %vm209, %v1673, 0.0
    %v1680 = vrot.slane %v1676, 1
    %v1681 = vrot.slane %v1677, 1
    %v1682 = vsel %vm117, %v1680, %v1681
    %v1683 = vsel %vm88, %v1682, 0
    %v1685 = vsel %vm88, %v1681, 0
    %1687 = vmatpush.msra.mxu0 0.0
    %1688 = vmatpush.msra.mxu0 0.0
    %1689 = vmatpush.msra.mxu0 0.0
    %1690 = vmatpush.msra.mxu0 0.0
    %1691 = vmatpush.msra.mxu0 0.0
    %1692 = vmatpush.msra.mxu0 0.0
    %1693 = vmatpush.msra.mxu0 0.0
    %1694 = vmatpush.msra.mxu0 0.0
    %1695 = vmatpush.msra.mxu0 0.0
    %1696 = vmatpush.msra.mxu0 0.0
    %1697 = vmatpush.msra.mxu0 0.0
    %1698 = vmatpush.msra.mxu0 0.0
    %1699 = vmatpush.msra.mxu0 0.0
    %1700 = vmatpush.msra.mxu0 0.0
    %1701 = vmatpush.msra.mxu0 %v58
    %1702 = vmatpush.msra.mxu0 %v57
    %1703 = vmatmul.f32.gmra.mxu0 %v1683
    %v1704 = vpop.f32.mrf.mxu0
    %v1705 = vadd.f32 0.0, %v1704
    %1706 = vmatmul.f32.gmra.mxu0 %v1685
    %v1707 = vpop.f32.mrf.mxu0
    %v1708 = vadd.f32 0.0, %v1707
    %1709 = vdwg.mxu0
    %v1710 = vsel %vm88, %v1676, 0
    %v1712 = vsel %vm88, %v1677, 0
    %1714 = vmatpush.msra.mxu0 0.0
    %1715 = vmatpush.msra.mxu0 0.0
    %1716 = vmatpush.msra.mxu0 0.0
    %1717 = vmatpush.msra.mxu0 0.0
    %1718 = vmatpush.msra.mxu0 0.0
    %1719 = vmatpush.msra.mxu0 0.0
    %1720 = vmatpush.msra.mxu0 0.0
    %1721 = vmatpush.msra.mxu0 0.0
    %1722 = vmatpush.msra.mxu0 0.0
    %1723 = vmatpush.msra.mxu0 0.0
    %1724 = vmatpush.msra.mxu0 0.0
    %1725 = vmatpush.msra.mxu0 0.0
    %1726 = vmatpush.msra.mxu0 0.0
    %1727 = vmatpush.msra.mxu0 0.0
    %1728 = vmatpush.msra.mxu0 %v55
    %1729 = vmatpush.msra.mxu0 %v54
    %1730 = vmatmul.f32.gmra.mxu0 %v1710
    %v1731 = vpop.f32.mrf.mxu0
    %v1732 = vadd.f32 %v1705, %v1731
    %1733 = vmatmul.f32.gmra.mxu0 %v1712
    %v1734 = vpop.f32.mrf.mxu0
    %v1735 = vadd.f32 %v1708, %v1734
    %1736 = vdwg.mxu0
    %v1737 = vrot.slane %v1676, 2
    %v1738 = vrot.slane %v1677, 2
    %v1739 = vsel %vm209, %v1737, %v1738
    %v1740 = vsel %vm88, %v1739, 0
    %v1742 = vsel %vm88, %v1738, 0
    %1744 = vmatpush.msra.mxu0 0.0
    %1745 = vmatpush.msra.mxu0 0.0
    %1746 = vmatpush.msra.mxu0 0.0
    %1747 = vmatpush.msra.mxu0 0.0
    %1748 = vmatpush.msra.mxu0 0.0
    %1749 = vmatpush.msra.mxu0 0.0
    %1750 = vmatpush.msra.mxu0 0.0
    %1751 = vmatpush.msra.mxu0 0.0
    %1752 = vmatpush.msra.mxu0 0.0
    %1753 = vmatpush.msra.mxu0 0.0
    %1754 = vmatpush.msra.mxu0 0.0
    %1755 = vmatpush.msra.mxu0 0.0
    %1756 = vmatpush.msra.mxu0 0.0
    %1757 = vmatpush.msra.mxu0 0.0
    %1758 = vmatpush.msra.mxu0 %v61
    %1759 = vmatpush.msra.mxu0 %v60
    %1760 = vmatmul.f32.gmra.mxu0 %v1740
    %v1761 = vpop.f32.mrf.mxu0
    %v1762 = vadd.f32 0.0, %v1761
    %1763 = vmatmul.f32.gmra.mxu0 %v1742
    %v1764 = vpop.f32.mrf.mxu0
    %v1765 = vadd.f32 0.0, %v1764
    %1766 = vdwg.mxu0
    %v1767 = vadd.f32 %v1732, %v1762
    %v1768 = vadd.f32 %v1735, %v1765
    %v1769 = vrot.slane %v1676, 3
    %v1770 = vrot.slane %v1677, 3
    %v1771 = vsel %vm263, %v1769, %v1770
    %v1772 = vsel %vm88, %v1771, 0
    %v1774 = vsel %vm88, %v1770, 0
    %1776 = vmatpush.msra.mxu0 0.0
    %1777 = vmatpush.msra.mxu0 0.0
    %1778 = vmatpush.msra.mxu0 0.0
    %1779 = vmatpush.msra.mxu0 0.0
    %1780 = vmatpush.msra.mxu0 0.0
    %1781 = vmatpush.msra.mxu0 0.0
    %1782 = vmatpush.msra.mxu0 0.0
    %1783 = vmatpush.msra.mxu0 0.0
    %1784 = vmatpush.msra.mxu0 0.0
    %1785 = vmatpush.msra.mxu0 0.0
    %1786 = vmatpush.msra.mxu0 0.0
    %1787 = vmatpush.msra.mxu0 0.0
    %1788 = vmatpush.msra.mxu0 0.0
    %1789 = vmatpush.msra.mxu0 0.0
    %1790 = vmatpush.msra.mxu0 %v64
    %1791 = vmatpush.msra.mxu0 %v63
    %1792 = vmatmul.f32.gmra.mxu0 %v1772
    %v1793 = vpop.f32.mrf.mxu0
    %v1794 = vadd.f32 0.0, %v1793
    %1795 = vmatmul.f32.gmra.mxu0 %v1774
    %v1796 = vpop.f32.mrf.mxu0
    %v1797 = vadd.f32 0.0, %v1796
    %1798 = vdwg.mxu0
    %v1799 = vadd.f32 %v1767, %v1794
    %v1800 = vadd.f32 %v1768, %v1797
    %v1801 = vrot.slane %v1676, 4
    %v1802 = vrot.slane %v1677, 4
    %v1803 = vsel %vm136, %v1801, %v1802
    %v1804 = vsel %vm88, %v1803, 0
    %v1806 = vsel %vm88, %v1802, 0
    %1808 = vmatpush.msra.mxu0 0.0
    %1809 = vmatpush.msra.mxu0 0.0
    %1810 = vmatpush.msra.mxu0 0.0
    %1811 = vmatpush.msra.mxu0 0.0
    %1812 = vmatpush.msra.mxu0 0.0
    %1813 = vmatpush.msra.mxu0 0.0
    %1814 = vmatpush.msra.mxu0 0.0
    %1815 = vmatpush.msra.mxu0 0.0
    %1816 = vmatpush.msra.mxu0 0.0
    %1817 = vmatpush.msra.mxu0 0.0
    %1818 = vmatpush.msra.mxu0 0.0
    %1819 = vmatpush.msra.mxu0 0.0
    %1820 = vmatpush.msra.mxu0 0.0
    %1821 = vmatpush.msra.mxu0 0.0
    %1822 = vmatpush.msra.mxu0 %v67
    %1823 = vmatpush.msra.mxu0 %v66
    %1824 = vmatmul.f32.gmra.mxu0 %v1804
    %v1825 = vpop.f32.mrf.mxu0
    %v1826 = vadd.f32 0.0, %v1825
    %1827 = vmatmul.f32.gmra.mxu0 %v1806
    %v1828 = vpop.f32.mrf.mxu0
    %v1829 = vadd.f32 0.0, %v1828
    %1830 = vdwg.mxu0
    %v1831 = vadd.f32 %v1799, %v1826
    %v1832 = vadd.f32 %v1800, %v1829
    %v1833 = vrot.slane %v1676, 5
    %v1834 = vrot.slane %v1677, 5
    %v1835 = vsel %vm602, %v1833, %v1834
    %v1836 = vsel %vm88, %v1835, 0
    %v1838 = vsel %vm88, %v1834, 0
    %1840 = vmatpush.msra.mxu0 0.0
    %1841 = vmatpush.msra.mxu0 0.0
    %1842 = vmatpush.msra.mxu0 0.0
    %1843 = vmatpush.msra.mxu0 0.0
    %1844 = vmatpush.msra.mxu0 0.0
    %1845 = vmatpush.msra.mxu0 0.0
    %1846 = vmatpush.msra.mxu0 0.0
    %1847 = vmatpush.msra.mxu0 0.0
    %1848 = vmatpush.msra.mxu0 0.0
    %1849 = vmatpush.msra.mxu0 0.0
    %1850 = vmatpush.msra.mxu0 0.0
    %1851 = vmatpush.msra.mxu0 0.0
    %1852 = vmatpush.msra.mxu0 0.0
    %1853 = vmatpush.msra.mxu0 0.0
    %1854 = vmatpush.msra.mxu0 %v70
    %1855 = vmatpush.msra.mxu0 %v69
    %1856 = vmatmul.f32.gmra.mxu0 %v1836
    %v1857 = vpop.f32.mrf.mxu0
    %v1858 = vadd.f32 0.0, %v1857
    %1859 = vmatmul.f32.gmra.mxu0 %v1838
    %v1860 = vpop.f32.mrf.mxu0
    %v1861 = vadd.f32 0.0, %v1860
    %1862 = vdwg.mxu0
    %v1863 = vadd.f32 %v1831, %v1858
    %v1864 = vadd.f32 %v1832, %v1861
    %v1865 = vrot.slane %v1676, 6
    %v1866 = vrot.slane %v1677, 6
    %v1867 = vsel %vm103, %v1865, %v1866
    %v1868 = vsel %vm103, %v1866, %v948
    %v1869 = vsel %vm88, %v1867, 0
    %v1871 = vsel %vm88, %v1868, 0
    %1873 = vmatpush.msra.mxu0 0.0
    %1874 = vmatpush.msra.mxu0 0.0
    %1875 = vmatpush.msra.mxu0 0.0
    %1876 = vmatpush.msra.mxu0 0.0
    %1877 = vmatpush.msra.mxu0 0.0
    %1878 = vmatpush.msra.mxu0 0.0
    %1879 = vmatpush.msra.mxu0 0.0
    %1880 = vmatpush.msra.mxu0 0.0
    %1881 = vmatpush.msra.mxu0 0.0
    %1882 = vmatpush.msra.mxu0 0.0
    %1883 = vmatpush.msra.mxu0 0.0
    %1884 = vmatpush.msra.mxu0 0.0
    %1885 = vmatpush.msra.mxu0 0.0
    %1886 = vmatpush.msra.mxu0 0.0
    %1887 = vmatpush.msra.mxu0 %v73
    %1888 = vmatpush.msra.mxu0 %v72
    %1889 = vmatmul.f32.gmra.mxu0 %v1869
    %v1890 = vpop.f32.mrf.mxu0
    %v1891 = vadd.f32 0.0, %v1890
    %1892 = vmatmul.f32.gmra.mxu0 %v1871
    %v1893 = vpop.f32.mrf.mxu0
    %v1894 = vadd.f32 0.0, %v1893
    %1895 = vdwg.mxu0
    %v1896 = vadd.f32 %v1863, %v1891
    %v1897 = vadd.f32 %v1864, %v1894
    %v1898 = vrot.slane %v1676, 7
    %v1899 = vrot.slane %v1677, 7
    %v1900 = vsel %vm684, %v1898, %v1899
    %v1901 = vsel %vm684, %v1899, %v690
    %v1902 = vsel %vm88, %v1900, 0
    %v1904 = vsel %vm88, %v1901, 0
    %1906 = vmatpush.msra.mxu0 0.0
    %1907 = vmatpush.msra.mxu0 0.0
    %1908 = vmatpush.msra.mxu0 0.0
    %1909 = vmatpush.msra.mxu0 0.0
    %1910 = vmatpush.msra.mxu0 0.0
    %1911 = vmatpush.msra.mxu0 0.0
    %1912 = vmatpush.msra.mxu0 0.0
    %1913 = vmatpush.msra.mxu0 0.0
    %1914 = vmatpush.msra.mxu0 0.0
    %1915 = vmatpush.msra.mxu0 0.0
    %1916 = vmatpush.msra.mxu0 0.0
    %1917 = vmatpush.msra.mxu0 0.0
    %1918 = vmatpush.msra.mxu0 0.0
    %1919 = vmatpush.msra.mxu0 0.0
    %1920 = vmatpush.msra.mxu0 %v76
    %1921 = vmatpush.msra.mxu0 %v75
    %1922 = vmatmul.f32.gmra.mxu0 %v1902
    %v1923 = vpop.f32.mrf.mxu0
    %v1924 = vadd.f32 0.0, %v1923
    %1925 = vmatmul.f32.gmra.mxu0 %v1904
    %v1926 = vpop.f32.mrf.mxu0
    %v1927 = vadd.f32 0.0, %v1926
    %1928 = vdwg.mxu0
    %v1929 = vadd.f32 %v1896, %v1924
    %v1930 = vadd.f32 %v1897, %v1927
    %v1931 = vadd.f32 %v1929, %v1013
    %v1932 = vadd.f32 %v1930, %v1013
    %v1933 = vmax.f32 %v1931, 0.0
    %v1934 = vmax.f32 %v1932, 0.0
    %1935 = vst.msk [vmem:[#allocation4 + $0x1] sm:$0xff] %vm88, %v1933
    %1936 = vst.msk [vmem:[#allocation4 + $0x9] sm:$0x7] %vm1020, %v1934
    %v1937 = vld [vmem:[#allocation4] ss:$2 sm:$0x3f]
    %v1938 = vld [vmem:[%s1023] ss:$2 sm:$0x3f]
    %v1939 = vmax.f32 %v1937, %v1938
    %v1941 = vsel %vm209, %v1939, 0
    %1943 = vmatpush.msra.mxu0 0.0
    %1944 = vmatpush.msra.mxu0 0.0
    %1945 = vmatpush.msra.mxu0 0.0
    %1946 = vmatpush.msra.mxu0 0.0
    %1947 = vmatpush.msra.mxu0 0.0
    %1948 = vmatpush.msra.mxu0 0.0
    %1949 = vmatpush.msra.mxu0 0.0
    %1950 = vmatpush.msra.mxu0 0.0
    %1951 = vmatpush.msra.mxu0 0.0
    %1952 = vmatpush.msra.mxu0 0.0
    %1953 = vmatpush.msra.mxu0 0.0
    %1954 = vmatpush.msra.mxu0 0.0
    %1955 = vmatpush.msra.mxu0 0.0
    %1956 = vmatpush.msra.mxu0 0.0
    %1957 = vmatpush.msra.mxu0 0.0
    %1958 = vmatpush.msra.mxu0 %v1941
    %1959 = vmatmul.f32.gmra.mxu0 %v1028
    %v1960 = vpop.f32.mrf.mxu0
    %v1961 = vadd.f32 0.0, %v1960
    %1962 = vdwg.mxu0
    %s1963 = scalar_lea.vmem [#allocation5], 4
    %1964 = vst.msk [vmem:[%s1963] sm:$0xf] %vm91, %v1961
    // Predicated region
    $region34: #{_lambda_.1} parent=1 // pred_check
      _
    $region35: #{_lambda_.1} parent=1 // pred_check_branch
      %1966 = sbr.rel (0) target = $region37
    $region36: #{_lambda_.1} parent=1 // pred_region
      %1968 = vsyncadd [#allocation6], 0
      %s1969 = sshll.u32 [#allocation5], 4
      %s1970 = int_to_ptr.vmem [resolvable:$true] %s1969
      %s1971 = sshll.u32 %s8, 4
      %s1972 = int_to_ptr.hbm [resolvable:$true] %s1971
      %1977 = dma.vmem_to_hbm [thread:$0]  %s1970, 128, %s1972, [#allocation6], 64, 64, 4
    $region37: #{_lambda_.1} parent=1 // pred_fallthru
      _
    // Predicated region
    $region38: #{_lambda_.1} parent=1 // pred_check
      _
    $region39: #{_lambda_.1} parent=1 // pred_check_branch
      %1979 = sbr.rel (0) target = $region41
    $region40: #{_lambda_.1} parent=1 // pred_region
      %1981 = dma.done [#allocation6], 128
    $region41: #{_lambda_.1} parent=1 // pred_fallthru
      _
    %1982 = vsyncpa [#allocation6], 1

</llo_original>
